<compile_context>
chip_gen: v6e
topology: v6e:2x2x1
jax: 0.10.0
libtpu: 0.0.40
codegen_flags: <defaults>
</compile_context>

<pallas_src>
import jax
import jax.numpy as jnp
from jax.experimental import pallas as pl
from jax.experimental.pallas import tpu as pltpu


def _round_up(v, m):
    return ((v + m - 1) // m) * m


# ---------------------------------------------------------------------------
# Fused kernel: backbone 1x1 conv + neck (1x1/ReLU/1x1/Sigmoid) + prototype
# distances & densities + fused full-spatial pooling + fused classifier head.
# Grid = (batch, spatial tiles).  Everything is channel-first: feature maps
# are (channels, hw) with hw on the lane axis.
# ---------------------------------------------------------------------------
def _make_feature_kernel(hw_tile, hw_valid, needs_mask, cp, nc):
    def kernel(x_ref, wbt_ref, bb_ref, w1t_ref, b1_ref, w2t_ref, b2_ref,
               pm2_ref, psq_ref, wclf_ref,
               dens_ref, dist_ref, pred_ref,
               pmin_ref):
        t = pl.program_id(1)
        n_t = pl.num_programs(1)

        x = x_ref[0]                                              # (Cin, hw) f32

        # synthetic backbone: 1x1 conv + ReLU        h0 = Wb^T x + bb
        h0 = jnp.dot(wbt_ref[...], x, preferred_element_type=jnp.float32)
        h0 = jnp.maximum(h0 + bb_ref[...], 0.0)                   # (Cb, hw)

        # neck conv1 (1x1) + ReLU
        h1 = jnp.dot(w1t_ref[...], h0, preferred_element_type=jnp.float32)
        h1 = jnp.maximum(h1 + b1_ref[...], 0.0)                   # (L, hw)

        # neck conv2 (1x1) + Sigmoid (EUP slot)
        h2 = jnp.dot(w2t_ref[...], h1, preferred_element_type=jnp.float32)
        h2 = jax.nn.sigmoid(h2 + b2_ref[...])                     # (L, hw)

        # prototype module: squared L2 distance + Gaussian density.
        # pm2 = -2 * protos was folded once in the wrapper.
        x_sq = jnp.sum(h2 * h2, axis=0, keepdims=True)            # (1, hw)
        xp2 = jnp.dot(pm2_ref[...], h2,
                      preferred_element_type=jnp.float32)          # (CP, hw)
        dist = jnp.maximum(x_sq + psq_ref[...] + xp2, 0.0)        # (CP, hw) f32
        density = jnp.exp(-dist)

        # bf16 stores (accumulation stayed f32): halves the HBM write bytes
        # of the two write-bound outputs.
        dist_ref[0] = dist.astype(dist_ref.dtype)
        dens_ref[0] = density.astype(dens_ref.dtype)

        # Fused MaxPool2d((H, W)): max_hw exp(-dist) == exp(-min_hw dist).
        if needs_mask:
            pos = t * hw_tile + jax.lax.broadcasted_iota(jnp.int32,
                                                         dist.shape, 1)
            dist_for_min = jnp.where(pos < hw_valid, dist, jnp.inf)
        else:
            dist_for_min = dist
        tile_min = jnp.min(dist_for_min, axis=-1, keepdims=True)  # (CP, 1)

        @pl.when(t == 0)
        def _init():
            pmin_ref[...] = jnp.full((cp, 1), jnp.inf, jnp.float32)

        pmin_ref[...] = jnp.minimum(pmin_ref[...], tile_min)

        # Fused classifier head (Linear, bias=False) on the final spatial step;
        # the pred output block is resident across t and flushed once per b.
        @pl.when(t == n_t - 1)
        def _head():
            pooled_density = jnp.exp(-pmin_ref[...])               # (CP, 1)
            pred = jnp.sum(wclf_ref[...] * pooled_density,
                           axis=0, keepdims=True)                  # (1, NC)
            pred_ref[0] = pred

    return kernel


# ---------------------------------------------------------------------------
# Wrapper
# ---------------------------------------------------------------------------
def protopnet_forward(x_nchw, params, *, num_classes, num_protos):
    B, Cin, H, W = x_nchw.shape
    HW = H * W
    CP = num_classes * num_protos
    NC = num_classes

    wb, bb = params["wb"], params["bb"]        # (Cin, Cb), (1, Cb)
    w1, b1 = params["w1"], params["b1"]        # (Cb, L),  (1, L)
    w2, b2 = params["w2"], params["b2"]        # (L, L),   (1, L)
    protos = params["protos"]                  # (CP, L)
    wclf = params["wclf"]                      # (CP, NC)
    Cb = wb.shape[1]
    L = w2.shape[1]

    # ---------------- spatial padding / VMEM-budget tile selection ----------
    HWp = _round_up(HW, 128) if HW >= 128 else HW
    needs_mask = HWp != HW

    try:
        vmem_phys = int(getattr(pltpu.get_tpu_info(), "vmem_capacity_bytes",
                                64 * 1024 * 1024))
    except Exception:                                   # pragma: no cover
        vmem_phys = 64 * 1024 * 1024                    # safe on every gen

    # rough per-spatial-column VMEM bytes: double-buffered f32 input column,
    # double-buffered bf16 dist/density output columns, f32 live temps.
    bytes_per_col = (4 * Cin * 2) + (2 * CP * 2 * 2) + 4 * (Cb + 2 * L + 3 * CP)
    fixed_bytes = 4 * 2 * (Cb * Cin + Cb + L * Cb + L + L * L + L
                           + CP * L + CP + CP * NC) + 4 * CP
    budget = max(int(0.375 * vmem_phys) - fixed_bytes, 256 * 1024)

    if HWp % 128 == 0:
        cands = [c for c in range(128, HWp + 1, 128) if HWp % c == 0]
        fits = [c for c in cands if c * bytes_per_col <= budget] or [128]
        deep = [c for c in fits if HWp // c >= 4]       # prefer >=4 t-steps
        two = [c for c in fits if HWp // c >= 2]        # else >=2 (pipelining)
        hw_tile = max(deep) if deep else (max(two) if two else max(fits))
    else:
        hw_tile = HWp                                   # HW < 128: one full tile

    n_t = HWp // hw_tile
    grid = (B, n_t)                                     # batch axis >= 2 when B >= 2

    vmem_limit = int(min(0.75 * vmem_phys,              # <= ~48 MiB on v7x
                         max(32 * 1024 * 1024,
                             2 * (fixed_bytes + hw_tile * bytes_per_col))))

    # --------------------- one-time parameter layout prep -------------------
    wbt = wb.T                                          # (Cb, Cin)
    bbc = bb.reshape(Cb, 1)
    w1t = w1.T                                          # (L, Cb)
    b1c = b1.reshape(L, 1)
    w2t = w2.T                                          # (L, L)
    b2c = b2.reshape(L, 1)
    pm2 = (-2.0 * protos).astype(jnp.float32)           # fold -2 into constant
    psq = jnp.sum(protos * protos, axis=-1).reshape(CP, 1)

    x3 = x_nchw.reshape(B, Cin, HW)                     # NCHW is already channel-first
    if needs_mask:
        x3 = jnp.pad(x3, ((0, 0), (0, 0), (0, HWp - HW)))

    kernel = _make_feature_kernel(hw_tile, HW, needs_mask, CP, NC)

    dens_p, dist_p, pred3 = pl.pallas_call(
        kernel,
        out_shape=(
            jax.ShapeDtypeStruct((B, CP, HWp), jnp.bfloat16),   # density
            jax.ShapeDtypeStruct((B, CP, HWp), jnp.bfloat16),   # dist
            jax.ShapeDtypeStruct((B, 1, NC), jnp.float32),      # pred
        ),
        grid=grid,
        in_specs=[
            pl.BlockSpec((1, Cin, hw_tile), lambda b, t: (b, 0, t)),  # x columns
            pl.BlockSpec((Cb, Cin), lambda b, t: (0, 0)),             # backbone W^T
            pl.BlockSpec((Cb, 1),   lambda b, t: (0, 0)),             # backbone b
            pl.BlockSpec((L, Cb),   lambda b, t: (0, 0)),             # neck conv1 W^T
            pl.BlockSpec((L, 1),    lambda b, t: (0, 0)),             # neck conv1 b
            pl.BlockSpec((L, L),    lambda b, t: (0, 0)),             # neck conv2 W^T
            pl.BlockSpec((L, 1),    lambda b, t: (0, 0)),             # neck conv2 b
            pl.BlockSpec((CP, L),   lambda b, t: (0, 0)),             # -2 * protos
            pl.BlockSpec((CP, 1),   lambda b, t: (0, 0)),             # ||proto||^2
            pl.BlockSpec((CP, NC),  lambda b, t: (0, 0)),             # classifier W
        ],
        out_specs=(
            pl.BlockSpec((1, CP, hw_tile), lambda b, t: (b, 0, t)),
            pl.BlockSpec((1, CP, hw_tile), lambda b, t: (b, 0, t)),
            pl.BlockSpec((1, 1, NC),       lambda b, t: (b, 0, 0)),   # resident over t
        ),
        scratch_shapes=[pltpu.VMEM((CP, 1), jnp.float32)],            # running min dist
        compiler_params=pltpu.CompilerParams(
            dimension_semantics=("parallel", "arbitrary"),
            vmem_limit_bytes=vmem_limit),
    )(x3, wbt, bbc, w1t, b1c, w2t, b2c, pm2, psq, wclf)

    pred = pred3.reshape(B, NC)
    # (B, CP, HW) -> (B, C, P, H, W) is a pure reshape: no transpose pass.
    proto_density = dens_p[:, :, :HW].reshape(B, num_classes, num_protos, H, W)
    proto_dist = dist_p[:, :, :HW].reshape(B, num_classes, num_protos, H, W)
    return pred, (proto_density, proto_dist)


# ---------------------------------------------------------------------------
# Pure-JAX reference (sanity check of the kernel path)
# ---------------------------------------------------------------------------
def _to_bcphw(a, B, H, W, C, P):
    return jnp.transpose(a.reshape(B, H, W, C, P), (0, 3, 4, 1, 2))


def protopnet_forward_ref(x_nchw, params, *, num_classes, num_protos):
    B, Cin, H, W = x_nchw.shape
    x = jnp.transpose(x_nchw, (0, 2, 3, 1)).reshape(-1, Cin)
    h0 = jnp.maximum(x @ params["wb"] + params["bb"], 0.0)
    h1 = jnp.maximum(h0 @ params["w1"] + params["b1"], 0.0)
    h2 = jax.nn.sigmoid(h1 @ params["w2"] + params["b2"])
    protos = params["protos"]
    dist = (jnp.sum(h2 * h2, -1, keepdims=True)
            + jnp.sum(protos * protos, -1)[None, :]
            - 2.0 * h2 @ protos.T)
    dist = jnp.maximum(dist, 0.0)
    density = jnp.exp(-dist)
    CP = num_classes * num_protos
    pooled = jnp.max(density.reshape(B, H * W, CP), axis=1)
    pred = pooled @ params["wclf"]
    density_b = _to_bcphw(density, B, H, W, num_classes, num_protos)
    dist_b = _to_bcphw(dist, B, H, W, num_classes, num_protos)
    return pred, density_b, dist_b


if __name__ == "__main__":
    # small shapes consistent with the module
    B, Cin, H, W = 2, 4, 16, 16          # backbone.out_width == W, out_height == H
    backbone_channels = 32               # backbone.out_channels
    latent_channels = 16
    num_classes = 4
    num_protos = 8
    CP = num_classes * num_protos

    key = jax.random.PRNGKey(0)
    ks = jax.random.split(key, 9)
    params = {
        "wb":     0.2 * jax.random.normal(ks[0], (Cin, backbone_channels), jnp.float32),
        "bb":     0.1 * jax.random.normal(ks[1], (1, backbone_channels), jnp.float32),
        "w1":     0.2 * jax.random.normal(ks[2], (backbone_channels, latent_channels), jnp.float32),
        "b1":     0.1 * jax.random.normal(ks[3], (1, latent_channels), jnp.float32),
        "w2":     0.2 * jax.random.normal(ks[4], (latent_channels, latent_channels), jnp.float32),
        "b2":     0.1 * jax.random.normal(ks[5], (1, latent_channels), jnp.float32),
        "protos": jax.random.uniform(ks[6], (CP, latent_channels), jnp.float32),
        # nn.Linear(C*P, num_classes, bias=False): stored pre-transposed (CP, num_classes)
        "wclf":   0.2 * jax.random.normal(ks[7], (CP, num_classes), jnp.float32),
    }
    x = jax.random.normal(ks[8], (B, Cin, H, W), jnp.float32)

    pred, (proto_density, proto_dist) = protopnet_forward(
        x, params, num_classes=num_classes, num_protos=num_protos)
    jax.block_until_ready((pred, proto_density, proto_dist))

    assert pred.shape == (B, num_classes)
    assert proto_density.shape == (B, num_classes, num_protos, H, W)
    assert proto_dist.shape == (B, num_classes, num_protos, H, W)

    pred_ref, density_ref, dist_ref = protopnet_forward_ref(
        x, params, num_classes=num_classes, num_protos=num_protos)
    assert jnp.allclose(pred, pred_ref, rtol=1e-2, atol=1e-2)
    assert jnp.allclose(proto_density.astype(jnp.float32), density_ref,
                        rtol=1e-2, atol=1e-2)
    assert jnp.allclose(proto_dist.astype(jnp.float32), dist_ref,
                        rtol=1e-2, atol=1e-2)

    print("KERNEL_OK")
</pallas_src>

<mosaic_0001>
module attributes {stable_mosaic.version = 11 : i64} {
  func.func @kernel(%arg0: i32, %arg1: i32, %arg2: memref<1x4x128xf32, #tpu.memory_space<vmem>>, %arg3: memref<32x4xf32, #tpu.memory_space<vmem>>, %arg4: memref<32x1xf32, #tpu.memory_space<vmem>>, %arg5: memref<16x32xf32, #tpu.memory_space<vmem>>, %arg6: memref<16x1xf32, #tpu.memory_space<vmem>>, %arg7: memref<16x16xf32, #tpu.memory_space<vmem>>, %arg8: memref<16x1xf32, #tpu.memory_space<vmem>>, %arg9: memref<32x16xf32, #tpu.memory_space<vmem>>, %arg10: memref<32x1xf32, #tpu.memory_space<vmem>>, %arg11: memref<32x4xf32, #tpu.memory_space<vmem>>, %arg12: memref<1x32x128xbf16, #tpu.memory_space<vmem>>, %arg13: memref<1x32x128xbf16, #tpu.memory_space<vmem>>, %arg14: memref<1x1x4xf32, #tpu.memory_space<vmem>>, %arg15: memref<32x1xf32, #tpu.memory_space<vmem>>) attributes {dimension_semantics = [#tpu.dimension_semantics<parallel>, #tpu.dimension_semantics<arbitrary>], iteration_bounds = array<i64: 2, 2>, scalar_prefetch = 0 : i64, scratch_operands = 1 : i64, tpu.core_type = #tpu.core_type<tc>, window_params = [{transform_indices = @transform_0, window_bounds = array<i64: 1, 4, 128>}, {pipeline_mode = #tpu.pipeline_mode<synchronous>, transform_indices = @transform_1, window_bounds = array<i64: 32, 4>}, {pipeline_mode = #tpu.pipeline_mode<synchronous>, transform_indices = @transform_2, window_bounds = array<i64: 32, 1>}, {pipeline_mode = #tpu.pipeline_mode<synchronous>, transform_indices = @transform_3, window_bounds = array<i64: 16, 32>}, {pipeline_mode = #tpu.pipeline_mode<synchronous>, transform_indices = @transform_4, window_bounds = array<i64: 16, 1>}, {pipeline_mode = #tpu.pipeline_mode<synchronous>, transform_indices = @transform_5, window_bounds = array<i64: 16, 16>}, {pipeline_mode = #tpu.pipeline_mode<synchronous>, transform_indices = @transform_6, window_bounds = array<i64: 16, 1>}, {pipeline_mode = #tpu.pipeline_mode<synchronous>, transform_indices = @transform_7, window_bounds = array<i64: 32, 16>}, {pipeline_mode = #tpu.pipeline_mode<synchronous>, transform_indices = @transform_8, window_bounds = array<i64: 32, 1>}, {pipeline_mode = #tpu.pipeline_mode<synchronous>, transform_indices = @transform_9, window_bounds = array<i64: 32, 4>}, {transform_indices = @transform_10, window_bounds = array<i64: 1, 32, 128>}, {transform_indices = @transform_11, window_bounds = array<i64: 1, 32, 128>}, {transform_indices = @transform_12, window_bounds = array<i64: 1, 1, 4>}]} {
    %c0 = arith.constant 0 : index
    %c0_0 = arith.constant 0 : index
    %c0_1 = arith.constant 0 : index
    %0 = vector.load %arg2[%c0, %c0_0, %c0_1] : memref<1x4x128xf32, #tpu.memory_space<vmem>>, vector<1x4x128xf32>
    %1 = vector.shape_cast %0 : vector<1x4x128xf32> to vector<4x128xf32>
    %c0_2 = arith.constant 0 : index
    %c0_3 = arith.constant 0 : index
    %2 = vector.load %arg3[%c0_2, %c0_3] : memref<32x4xf32, #tpu.memory_space<vmem>>, vector<32x4xf32>
    %cst = arith.constant dense<0.000000e+00> : vector<32x128xf32>
    %3 = tpu.matmul %2, %1, %cst {dimension_numbers = #tpu.dot_dimension_numbers<[1], [0], [0], [1], [0, 0, 1, 1], [], []>} : vector<32x4xf32>, vector<4x128xf32>, vector<32x128xf32> -> vector<32x128xf32>
    %c0_4 = arith.constant 0 : index
    %c0_5 = arith.constant 0 : index
    %4 = vector.load %arg4[%c0_4, %c0_5] : memref<32x1xf32, #tpu.memory_space<vmem>>, vector<32x1xf32>
    %5 = vector.broadcast %4 : vector<32x1xf32> to vector<32x128xf32>
    %6 = arith.addf %3, %5 : vector<32x128xf32>
    %cst_6 = arith.constant 0.000000e+00 : f32
    %7 = vector.broadcast %cst_6 : f32 to vector<32x128xf32>
    %8 = arith.maximumf %6, %7 : vector<32x128xf32>
    %c0_7 = arith.constant 0 : index
    %c0_8 = arith.constant 0 : index
    %9 = vector.load %arg5[%c0_7, %c0_8] : memref<16x32xf32, #tpu.memory_space<vmem>>, vector<16x32xf32>
    %cst_9 = arith.constant dense<0.000000e+00> : vector<16x128xf32>
    %10 = tpu.matmul %9, %8, %cst_9 {dimension_numbers = #tpu.dot_dimension_numbers<[1], [0], [0], [1], [0, 0, 1, 1], [], []>} : vector<16x32xf32>, vector<32x128xf32>, vector<16x128xf32> -> vector<16x128xf32>
    %c0_10 = arith.constant 0 : index
    %c0_11 = arith.constant 0 : index
    %11 = vector.load %arg6[%c0_10, %c0_11] : memref<16x1xf32, #tpu.memory_space<vmem>>, vector<16x1xf32>
    %12 = vector.broadcast %11 : vector<16x1xf32> to vector<16x128xf32>
    %13 = arith.addf %10, %12 : vector<16x128xf32>
    %cst_12 = arith.constant 0.000000e+00 : f32
    %14 = vector.broadcast %cst_12 : f32 to vector<16x128xf32>
    %15 = arith.maximumf %13, %14 : vector<16x128xf32>
    %c0_13 = arith.constant 0 : index
    %c0_14 = arith.constant 0 : index
    %16 = vector.load %arg7[%c0_13, %c0_14] : memref<16x16xf32, #tpu.memory_space<vmem>>, vector<16x16xf32>
    %cst_15 = arith.constant dense<0.000000e+00> : vector<16x128xf32>
    %17 = tpu.matmul %16, %15, %cst_15 {dimension_numbers = #tpu.dot_dimension_numbers<[1], [0], [0], [1], [0, 0, 1, 1], [], []>} : vector<16x16xf32>, vector<16x128xf32>, vector<16x128xf32> -> vector<16x128xf32>
    %c0_16 = arith.constant 0 : index
    %c0_17 = arith.constant 0 : index
    %18 = vector.load %arg8[%c0_16, %c0_17] : memref<16x1xf32, #tpu.memory_space<vmem>>, vector<16x1xf32>
    %19 = vector.broadcast %18 : vector<16x1xf32> to vector<16x128xf32>
    %20 = arith.addf %17, %19 : vector<16x128xf32>
    %21 = arith.negf %20 : vector<16x128xf32>
    %22 = math.exp %21 : vector<16x128xf32>
    %cst_18 = arith.constant 1.000000e+00 : f32
    %23 = vector.broadcast %cst_18 : f32 to vector<16x128xf32>
    %24 = arith.addf %23, %22 : vector<16x128xf32>
    %25 = arith.divf %23, %24 : vector<16x128xf32>
    %26 = arith.mulf %25, %25 : vector<16x128xf32>
    %cst_19 = arith.constant dense<0.000000e+00> : vector<128xf32>
    %27 = vector.multi_reduction <add>, %26, %cst_19 [0] : vector<16x128xf32> to vector<128xf32>
    %28 = vector.shape_cast %27 : vector<128xf32> to vector<1x128xf32>
    %c0_20 = arith.constant 0 : index
    %c0_21 = arith.constant 0 : index
    %29 = vector.load %arg9[%c0_20, %c0_21] : memref<32x16xf32, #tpu.memory_space<vmem>>, vector<32x16xf32>
    %cst_22 = arith.constant dense<0.000000e+00> : vector<32x128xf32>
    %30 = tpu.matmul %29, %25, %cst_22 {dimension_numbers = #tpu.dot_dimension_numbers<[1], [0], [0], [1], [0, 0, 1, 1], [], []>} : vector<32x16xf32>, vector<16x128xf32>, vector<32x128xf32> -> vector<32x128xf32>
    %c0_23 = arith.constant 0 : index
    %c0_24 = arith.constant 0 : index
    %31 = vector.load %arg10[%c0_23, %c0_24] : memref<32x1xf32, #tpu.memory_space<vmem>>, vector<32x1xf32>
    %32 = vector.broadcast %28 : vector<1x128xf32> to vector<32x128xf32>
    %33 = vector.broadcast %31 : vector<32x1xf32> to vector<32x128xf32>
    %34 = arith.addf %32, %33 : vector<32x128xf32>
    %35 = arith.addf %34, %30 : vector<32x128xf32>
    %cst_25 = arith.constant 0.000000e+00 : f32
    %36 = vector.broadcast %cst_25 : f32 to vector<32x128xf32>
    %37 = arith.maximumf %35, %36 : vector<32x128xf32>
    %cst_26 = arith.constant 0.000000e+00 : f32
    %38 = vector.broadcast %cst_26 : f32 to vector<32x128xf32>
    %39 = arith.subf %38, %37 : vector<32x128xf32>
    %40 = math.exp %39 : vector<32x128xf32>
    %41 = arith.truncf %37 : vector<32x128xf32> to vector<32x128xbf16>
    %c0_27 = arith.constant 0 : index
    %c0_28 = arith.constant 0 : index
    %c0_29 = arith.constant 0 : index
    %42 = vector.load %arg13[%c0_27, %c0_28, %c0_29] : memref<1x32x128xbf16, #tpu.memory_space<vmem>>, vector<1x32x128xbf16>
    %43 = vector.shape_cast %42 : vector<1x32x128xbf16> to vector<32x128xbf16>
    %44 = vector.shape_cast %41 : vector<32x128xbf16> to vector<1x32x128xbf16>
    tpu.vector_store %arg13[%c0_27, %c0_28, %c0_29], %44 {strides = array<i32>} : memref<1x32x128xbf16, #tpu.memory_space<vmem>>, vector<1x32x128xbf16>,
    %45 = arith.truncf %40 : vector<32x128xf32> to vector<32x128xbf16>
    %c0_30 = arith.constant 0 : index
    %c0_31 = arith.constant 0 : index
    %c0_32 = arith.constant 0 : index
    %46 = vector.load %arg12[%c0_30, %c0_31, %c0_32] : memref<1x32x128xbf16, #tpu.memory_space<vmem>>, vector<1x32x128xbf16>
    %47 = vector.shape_cast %46 : vector<1x32x128xbf16> to vector<32x128xbf16>
    %48 = vector.shape_cast %45 : vector<32x128xbf16> to vector<1x32x128xbf16>
    tpu.vector_store %arg12[%c0_30, %c0_31, %c0_32], %48 {strides = array<i32>} : memref<1x32x128xbf16, #tpu.memory_space<vmem>>, vector<1x32x128xbf16>,
    %cst_33 = arith.constant dense<0x7F800000> : vector<32xf32>
    %49 = vector.multi_reduction <minimumf>, %37, %cst_33 [1] : vector<32x128xf32> to vector<32xf32>
    %50 = vector.shape_cast %49 : vector<32xf32> to vector<32x1xf32>
    %c0_i32 = arith.constant 0 : i32
    %51 = arith.cmpi eq, %arg1, %c0_i32 : i32
    %52 = arith.extui %51 : i1 to i32
    %c0_i32_34 = arith.constant 0 : i32
    %53 = arith.cmpi ne, %52, %c0_i32_34 : i32
    scf.if %53 {
      %cst_40 = arith.constant 0x7F800000 : f32
      %60 = vector.broadcast %cst_40 : f32 to vector<32x1xf32>
      %c0_41 = arith.constant 0 : index
      %c0_42 = arith.constant 0 : index
      %61 = vector.load %arg15[%c0_41, %c0_42] : memref<32x1xf32, #tpu.memory_space<vmem>>, vector<32x1xf32>
      tpu.vector_store %arg15[%c0_41, %c0_42], %60 {strides = array<i32>} : memref<32x1xf32, #tpu.memory_space<vmem>>, vector<32x1xf32>,
    } else {
    }
    %c0_35 = arith.constant 0 : index
    %c0_36 = arith.constant 0 : index
    %54 = vector.load %arg15[%c0_35, %c0_36] : memref<32x1xf32, #tpu.memory_space<vmem>>, vector<32x1xf32>
    %55 = arith.minimumf %54, %50 : vector<32x1xf32>
    %c0_37 = arith.constant 0 : index
    %c0_38 = arith.constant 0 : index
    %56 = vector.load %arg15[%c0_37, %c0_38] : memref<32x1xf32, #tpu.memory_space<vmem>>, vector<32x1xf32>
    tpu.vector_store %arg15[%c0_37, %c0_38], %55 {strides = array<i32>} : memref<32x1xf32, #tpu.memory_space<vmem>>, vector<32x1xf32>,
    %c1_i32 = arith.constant 1 : i32
    %57 = arith.cmpi eq, %arg1, %c1_i32 : i32
    %58 = arith.extui %57 : i1 to i32
    %c0_i32_39 = arith.constant 0 : i32
    %59 = arith.cmpi ne, %58, %c0_i32_39 : i32
    scf.if %59 {
      %c0_40 = arith.constant 0 : index
      %c0_41 = arith.constant 0 : index
      %60 = vector.load %arg15[%c0_40, %c0_41] : memref<32x1xf32, #tpu.memory_space<vmem>>, vector<32x1xf32>
      %cst_42 = arith.constant 0.000000e+00 : f32
      %61 = vector.broadcast %cst_42 : f32 to vector<32x1xf32>
      %62 = arith.subf %61, %60 : vector<32x1xf32>
      %63 = math.exp %62 : vector<32x1xf32>
      %c0_43 = arith.constant 0 : index
      %c0_44 = arith.constant 0 : index
      %64 = vector.load %arg11[%c0_43, %c0_44] : memref<32x4xf32, #tpu.memory_space<vmem>>, vector<32x4xf32>
      %65 = vector.broadcast %63 : vector<32x1xf32> to vector<32x4xf32>
      %66 = arith.mulf %64, %65 : vector<32x4xf32>
      %cst_45 = arith.constant dense<0.000000e+00> : vector<4xf32>
      %67 = vector.multi_reduction <add>, %66, %cst_45 [0] : vector<32x4xf32> to vector<4xf32>
      %68 = vector.shape_cast %67 : vector<4xf32> to vector<1x4xf32>
      %c0_46 = arith.constant 0 : index
      %c0_47 = arith.constant 0 : index
      %c0_48 = arith.constant 0 : index
      %69 = vector.load %arg14[%c0_46, %c0_47, %c0_48] : memref<1x1x4xf32, #tpu.memory_space<vmem>>, vector<1x1x4xf32>
      %70 = vector.shape_cast %69 : vector<1x1x4xf32> to vector<1x4xf32>
      %71 = vector.shape_cast %68 : vector<1x4xf32> to vector<1x1x4xf32>
      tpu.vector_store %arg14[%c0_46, %c0_47, %c0_48], %71 {strides = array<i32>} : memref<1x1x4xf32, #tpu.memory_space<vmem>>, vector<1x1x4xf32>,
    } else {
    }
    return
  }
  func.func @transform_0(%arg0: i32, %arg1: i32) -> (i32, i32, i32) {
    %c0_i32 = arith.constant 0 : i32
    %c0_i32_0 = arith.constant 0 : i32
    return %arg0, %c0_i32, %arg1 : i32, i32, i32
  }
  func.func @transform_1(%arg0: i32, %arg1: i32) -> (i32, i32) {
    %c0_i32 = arith.constant 0 : i32
    %c0_i32_0 = arith.constant 0 : i32
    %c0_i32_1 = arith.constant 0 : i32
    return %c0_i32, %c0_i32_0 : i32, i32
  }
  func.func @transform_2(%arg0: i32, %arg1: i32) -> (i32, i32) {
    %c0_i32 = arith.constant 0 : i32
    %c0_i32_0 = arith.constant 0 : i32
    %c0_i32_1 = arith.constant 0 : i32
    return %c0_i32, %c0_i32_0 : i32, i32
  }
  func.func @transform_3(%arg0: i32, %arg1: i32) -> (i32, i32) {
    %c0_i32 = arith.constant 0 : i32
    %c0_i32_0 = arith.constant 0 : i32
    %c0_i32_1 = arith.constant 0 : i32
    return %c0_i32, %c0_i32_0 : i32, i32
  }
  func.func @transform_4(%arg0: i32, %arg1: i32) -> (i32, i32) {
    %c0_i32 = arith.constant 0 : i32
    %c0_i32_0 = arith.constant 0 : i32
    %c0_i32_1 = arith.constant 0 : i32
    return %c0_i32, %c0_i32_0 : i32, i32
  }
  func.func @transform_5(%arg0: i32, %arg1: i32) -> (i32, i32) {
    %c0_i32 = arith.constant 0 : i32
    %c0_i32_0 = arith.constant 0 : i32
    %c0_i32_1 = arith.constant 0 : i32
    return %c0_i32, %c0_i32_0 : i32, i32
  }
  func.func @transform_6(%arg0: i32, %arg1: i32) -> (i32, i32) {
    %c0_i32 = arith.constant 0 : i32
    %c0_i32_0 = arith.constant 0 : i32
    %c0_i32_1 = arith.constant 0 : i32
    return %c0_i32, %c0_i32_0 : i32, i32
  }
  func.func @transform_7(%arg0: i32, %arg1: i32) -> (i32, i32) {
    %c0_i32 = arith.constant 0 : i32
    %c0_i32_0 = arith.constant 0 : i32
    %c0_i32_1 = arith.constant 0 : i32
    return %c0_i32, %c0_i32_0 : i32, i32
  }
  func.func @transform_8(%arg0: i32, %arg1: i32) -> (i32, i32) {
    %c0_i32 = arith.constant 0 : i32
    %c0_i32_0 = arith.constant 0 : i32
    %c0_i32_1 = arith.constant 0 : i32
    return %c0_i32, %c0_i32_0 : i32, i32
  }
  func.func @transform_9(%arg0: i32, %arg1: i32) -> (i32, i32) {
    %c0_i32 = arith.constant 0 : i32
    %c0_i32_0 = arith.constant 0 : i32
    %c0_i32_1 = arith.constant 0 : i32
    return %c0_i32, %c0_i32_0 : i32, i32
  }
  func.func @transform_10(%arg0: i32, %arg1: i32) -> (i32, i32, i32) {
    %c0_i32 = arith.constant 0 : i32
    %c0_i32_0 = arith.constant 0 : i32
    return %arg0, %c0_i32, %arg1 : i32, i32, i32
  }
  func.func @transform_11(%arg0: i32, %arg1: i32) -> (i32, i32, i32) {
    %c0_i32 = arith.constant 0 : i32
    %c0_i32_0 = arith.constant 0 : i32
    return %arg0, %c0_i32, %arg1 : i32, i32, i32
  }
  func.func @transform_12(%arg0: i32, %arg1: i32) -> (i32, i32, i32) {
    %c0_i32 = arith.constant 0 : i32
    %c0_i32_0 = arith.constant 0 : i32
    %c0_i32_1 = arith.constant 0 : i32
    return %arg0, %c0_i32, %c0_i32_0 : i32, i32, i32
  }
}

</mosaic_0001>

<llo_original>
// kernel: tpu_custom_call.1
$region0: #{tpu_custom_call.1}
  #allocation0 [shape = 'u32[]', space=smem, size = 0x4, offset = 0x4, fixed_abs, tag = 'smem constant byte address 0x4 - core index']
  #allocation1 [shape = 'u32[144,128]{1,0:T(1,128)}', space=vmem, size = 0x12000, scoped, tag = 'internal scratch']
  #allocation2 [shape = 'f32[32,1]{1,0:T(8,128)}', space=vmem, size = 0x4000, scoped, tag = 'scratch operand']
  %s0 = inlined_call_operand.vmem [shape: f32[2,4,256], index: 0, kind: input, shape index: {}]
  %s1 = inlined_call_operand.vmem [shape: f32[32,4], index: 1, kind: input, shape index: {}]
  %s2 = inlined_call_operand.vmem [shape: f32[32,1], index: 2, kind: input, shape index: {}]
  %s3 = inlined_call_operand.vmem [shape: f32[16,32], index: 3, kind: input, shape index: {}]
  %s4 = inlined_call_operand.vmem [shape: f32[16,1], index: 4, kind: input, shape index: {}]
  %s5 = inlined_call_operand.vmem [shape: f32[16,16], index: 5, kind: input, shape index: {}]
  %s6 = inlined_call_operand.vmem [shape: f32[16,1], index: 6, kind: input, shape index: {}]
  %s7 = inlined_call_operand.vmem [shape: f32[32,16], index: 7, kind: input, shape index: {}]
  %s8 = inlined_call_operand.vmem [shape: f32[32,1], index: 8, kind: input, shape index: {}]
  %s9 = inlined_call_operand.vmem [shape: f32[32,4], index: 9, kind: input, shape index: {}]
  %s10 = inlined_call_operand.hbm [shape: bf16[2,32,256], index: 10, kind: output, shape index: {0}]
  %s11 = inlined_call_operand.hbm [shape: bf16[2,32,256], index: 11, kind: output, shape index: {1}]
  %s12 = inlined_call_operand.hbm [shape: f32[2,1,4], index: 12, kind: output, shape index: {2}]
  %13 = xla_tuple %s10, %s11, %s12
  %s14 = sld [smem:[#allocation0]]
  $region97: #{tpu_custom_call.1} parent=0
    _
  %s16 = ssub.s32 1, %s14
  %s17 = scalar_select 0, %s16, %s14
  $region1: #{tpu_custom_call.1} parent=0
    #allocation3 [shape = 'u8[16384]{0}', space=vmem, size = 0x4000, scoped, tag = 'output window, operand 0']
    #allocation4 [shape = 's32[2]{0}', space=sflag, size = 0x8, scoped, tag = 'scoped memory for tpu_custom_call.1']
    #allocation5 [shape = 'u8[16384]{0}', space=vmem, size = 0x4000, scoped, tag = 'output window, operand 1']
    #allocation6 [shape = 's32[2]{0}', space=sflag, size = 0x8, scoped, tag = 'scoped memory for tpu_custom_call.1']
    #allocation7 [shape = 'u8[1024]{0}', space=vmem, size = 0x400, scoped, tag = 'output window, operand 2']
    %18 = vsyncpa [#allocation4], 0
    %s19 = scalar_lea.sflag [#allocation4], 1
    %20 = vsyncpa %s19, 0
    %21 = vsyncpa [#allocation6], 0
    %s22 = scalar_lea.sflag [#allocation6], 1
    %23 = vsyncpa %s22, 0
    loop: start=0, step=1, limit=6
    $region2: #{tpu_custom_call.1} parent=1 // loop_pre_header
      _
    $region3: #{tpu_custom_call.1} parent=1 // loop_header
      %s25 = sphi 0, %s29
      %p26 = scmp.ge.s32.totalorder %s25, 6
      %s32 = sphi 0, %s44
      %s33 = sphi 0, %s40
      %s34 = sphi 0, %s32
      %s35 = sphi 0, %s33
      %s36 = sphi 0, %s34
      %s37 = sphi 0, %s35
      %s49 = sphi 0, %s51
      %s52 = sphi 0, %s49
      %s53 = sphi 0, %s52
      %s69 = sphi 0, %s53
      %s73 = sphi 0, %s73
      %s75 = sphi 0, %s73
      %s76 = sphi 0, %s75
      %s90 = sphi 0, %s76
      %s94 = sphi 0, %s94
      %s96 = sphi 0, %s94
      %s97 = sphi 0, %s96
      %s111 = sphi 0, %s97
      %s115 = sphi 0, %s115
      %s117 = sphi 0, %s115
      %s118 = sphi 0, %s117
      %s132 = sphi 0, %s118
      %s136 = sphi 0, %s136
      %s138 = sphi 0, %s136
      %s139 = sphi 0, %s138
      %s153 = sphi 0, %s139
      %s157 = sphi 0, %s157
      %s159 = sphi 0, %s157
      %s160 = sphi 0, %s159
      %s174 = sphi 0, %s160
      %s178 = sphi 0, %s178
      %s180 = sphi 0, %s178
      %s181 = sphi 0, %s180
      %s195 = sphi 0, %s181
      %s199 = sphi 0, %s199
      %s201 = sphi 0, %s199
      %s202 = sphi 0, %s201
      %s216 = sphi 0, %s202
      %s220 = sphi 0, %s220
      %s222 = sphi 0, %s220
      %s223 = sphi 0, %s222
      %s237 = sphi 0, %s223
      %s241 = sphi 0, %s241
      %s243 = sphi 0, %s241
      %s244 = sphi 0, %s243
      %s258 = sphi 0, %s244
      %s266 = sphi 0, %s268
      %s269 = sphi 0, %s266
      %s270 = sphi 0, %s269
      %s286 = sphi 0, %s270
      %s294 = sphi 0, %s296
      %s297 = sphi 0, %s294
      %s298 = sphi 0, %s297
      %s314 = sphi 0, %s298
      %s320 = sphi 0, %s322
      %s323 = sphi 0, %s320
      %s324 = sphi 0, %s323
      %s340 = sphi 0, %s324
    $region4: #{tpu_custom_call.1} parent=1 // loop_header_branch
      %28 = sbr.rel (%p26) target = $region8
    $region5: #{tpu_custom_call.1} parent=1 // loop_body
      %s30 = ssub.s32 %s25, 1
      %s31 = ssub.s32 %s25, 2
      %s38 = sadd.s32 1, %s33
      %p39 = scmp.ge.s32.totalorder %s38, 2
      %s40 = scalar_select %p39, 0, %s38
      %s41 = sadd.s32 1, %s32
      %s42 = scalar_select %p39, %s41, %s32
      %p43 = scmp.ge.s32.totalorder %s42, 2
      %s44 = scalar_select %p43, 0, %s42
      %s45 = ssub.s32 %s32, %s44
      %s46 = ssub.s32 %s33, %s40
      %s47 = sor.u32 %s45, %s46
      %p48 = scmp.eq.s32.totalorder %s47, 0
      %s50 = sadd.s32 %s49, 1
      %s51 = scalar_select %p48, %s49, %s50
      %p54 = pneg %p48
      %p55 = scmp.eq.s32.totalorder %s25, 3
      %p56 = por %p54, %p55
      %p57 = scmp.ne.s32.totalorder %s49, %s52
      %p58 = scmp.eq.s32.totalorder %s25, 0
      %p59 = por %p57, %p58
      %p60 = scmp.ne.s32.totalorder %s49, %s52
      %p61 = scmp.eq.s32.totalorder %s30, 3
      %p62 = por %p60, %p61
      %p63 = scmp.ne.s32.totalorder %s52, %s53
      %p64 = scmp.eq.s32.totalorder %s30, 0
      %p65 = por %p63, %p64
      %p66 = scmp.ne.s32.totalorder %s52, %s53
      %p67 = scmp.eq.s32.totalorder %s31, 3
      %p68 = por %p66, %p67
      %p70 = scmp.ne.s32.totalorder %s53, %s69
      %p71 = scmp.eq.s32.totalorder %s31, 0
      %p72 = por %p70, %p71
      %s74 = sadd.s32 %s73, 1
      %p77 = scmp.eq.s32.totalorder %s25, 3
      %p78 = scmp.ne.s32.totalorder %s73, %s75
      %p79 = scmp.eq.s32.totalorder %s25, 0
      %p80 = por %p78, %p79
      %p81 = scmp.ne.s32.totalorder %s73, %s75
      %p82 = scmp.eq.s32.totalorder %s30, 3
      %p83 = por %p81, %p82
      %p84 = scmp.ne.s32.totalorder %s75, %s76
      %p85 = scmp.eq.s32.totalorder %s30, 0
      %p86 = por %p84, %p85
      %p87 = scmp.ne.s32.totalorder %s75, %s76
      %p88 = scmp.eq.s32.totalorder %s31, 3
      %p89 = por %p87, %p88
      %p91 = scmp.ne.s32.totalorder %s76, %s90
      %p92 = scmp.eq.s32.totalorder %s31, 0
      %p93 = por %p91, %p92
      %s95 = sadd.s32 %s94, 1
      %p98 = scmp.eq.s32.totalorder %s25, 3
      %p99 = scmp.ne.s32.totalorder %s94, %s96
      %p100 = scmp.eq.s32.totalorder %s25, 0
      %p101 = por %p99, %p100
      %p102 = scmp.ne.s32.totalorder %s94, %s96
      %p103 = scmp.eq.s32.totalorder %s30, 3
      %p104 = por %p102, %p103
      %p105 = scmp.ne.s32.totalorder %s96, %s97
      %p106 = scmp.eq.s32.totalorder %s30, 0
      %p107 = por %p105, %p106
      %p108 = scmp.ne.s32.totalorder %s96, %s97
      %p109 = scmp.eq.s32.totalorder %s31, 3
      %p110 = por %p108, %p109
      %p112 = scmp.ne.s32.totalorder %s97, %s111
      %p113 = scmp.eq.s32.totalorder %s31, 0
      %p114 = por %p112, %p113
      %s116 = sadd.s32 %s115, 1
      %p119 = scmp.eq.s32.totalorder %s25, 3
      %p120 = scmp.ne.s32.totalorder %s115, %s117
      %p121 = scmp.eq.s32.totalorder %s25, 0
      %p122 = por %p120, %p121
      %p123 = scmp.ne.s32.totalorder %s115, %s117
      %p124 = scmp.eq.s32.totalorder %s30, 3
      %p125 = por %p123, %p124
      %p126 = scmp.ne.s32.totalorder %s117, %s118
      %p127 = scmp.eq.s32.totalorder %s30, 0
      %p128 = por %p126, %p127
      %p129 = scmp.ne.s32.totalorder %s117, %s118
      %p130 = scmp.eq.s32.totalorder %s31, 3
      %p131 = por %p129, %p130
      %p133 = scmp.ne.s32.totalorder %s118, %s132
      %p134 = scmp.eq.s32.totalorder %s31, 0
      %p135 = por %p133, %p134
      %s137 = sadd.s32 %s136, 1
      %p140 = scmp.eq.s32.totalorder %s25, 3
      %p141 = scmp.ne.s32.totalorder %s136, %s138
      %p142 = scmp.eq.s32.totalorder %s25, 0
      %p143 = por %p141, %p142
      %p144 = scmp.ne.s32.totalorder %s136, %s138
      %p145 = scmp.eq.s32.totalorder %s30, 3
      %p146 = por %p144, %p145
      %p147 = scmp.ne.s32.totalorder %s138, %s139
      %p148 = scmp.eq.s32.totalorder %s30, 0
      %p149 = por %p147, %p148
      %p150 = scmp.ne.s32.totalorder %s138, %s139
      %p151 = scmp.eq.s32.totalorder %s31, 3
      %p152 = por %p150, %p151
      %p154 = scmp.ne.s32.totalorder %s139, %s153
      %p155 = scmp.eq.s32.totalorder %s31, 0
      %p156 = por %p154, %p155
      %s158 = sadd.s32 %s157, 1
      %p161 = scmp.eq.s32.totalorder %s25, 3
      %p162 = scmp.ne.s32.totalorder %s157, %s159
      %p163 = scmp.eq.s32.totalorder %s25, 0
      %p164 = por %p162, %p163
      %p165 = scmp.ne.s32.totalorder %s157, %s159
      %p166 = scmp.eq.s32.totalorder %s30, 3
      %p167 = por %p165, %p166
      %p168 = scmp.ne.s32.totalorder %s159, %s160
      %p169 = scmp.eq.s32.totalorder %s30, 0
      %p170 = por %p168, %p169
      %p171 = scmp.ne.s32.totalorder %s159, %s160
      %p172 = scmp.eq.s32.totalorder %s31, 3
      %p173 = por %p171, %p172
      %p175 = scmp.ne.s32.totalorder %s160, %s174
      %p176 = scmp.eq.s32.totalorder %s31, 0
      %p177 = por %p175, %p176
      %s179 = sadd.s32 %s178, 1
      %p182 = scmp.eq.s32.totalorder %s25, 3
      %p183 = scmp.ne.s32.totalorder %s178, %s180
      %p184 = scmp.eq.s32.totalorder %s25, 0
      %p185 = por %p183, %p184
      %p186 = scmp.ne.s32.totalorder %s178, %s180
      %p187 = scmp.eq.s32.totalorder %s30, 3
      %p188 = por %p186, %p187
      %p189 = scmp.ne.s32.totalorder %s180, %s181
      %p190 = scmp.eq.s32.totalorder %s30, 0
      %p191 = por %p189, %p190
      %p192 = scmp.ne.s32.totalorder %s180, %s181
      %p193 = scmp.eq.s32.totalorder %s31, 3
      %p194 = por %p192, %p193
      %p196 = scmp.ne.s32.totalorder %s181, %s195
      %p197 = scmp.eq.s32.totalorder %s31, 0
      %p198 = por %p196, %p197
      %s200 = sadd.s32 %s199, 1
      %p203 = scmp.eq.s32.totalorder %s25, 3
      %p204 = scmp.ne.s32.totalorder %s199, %s201
      %p205 = scmp.eq.s32.totalorder %s25, 0
      %p206 = por %p204, %p205
      %p207 = scmp.ne.s32.totalorder %s199, %s201
      %p208 = scmp.eq.s32.totalorder %s30, 3
      %p209 = por %p207, %p208
      %p210 = scmp.ne.s32.totalorder %s201, %s202
      %p211 = scmp.eq.s32.totalorder %s30, 0
      %p212 = por %p210, %p211
      %p213 = scmp.ne.s32.totalorder %s201, %s202
      %p214 = scmp.eq.s32.totalorder %s31, 3
      %p215 = por %p213, %p214
      %p217 = scmp.ne.s32.totalorder %s202, %s216
      %p218 = scmp.eq.s32.totalorder %s31, 0
      %p219 = por %p217, %p218
      %s221 = sadd.s32 %s220, 1
      %p224 = scmp.eq.s32.totalorder %s25, 3
      %p225 = scmp.ne.s32.totalorder %s220, %s222
      %p226 = scmp.eq.s32.totalorder %s25, 0
      %p227 = por %p225, %p226
      %p228 = scmp.ne.s32.totalorder %s220, %s222
      %p229 = scmp.eq.s32.totalorder %s30, 3
      %p230 = por %p228, %p229
      %p231 = scmp.ne.s32.totalorder %s222, %s223
      %p232 = scmp.eq.s32.totalorder %s30, 0
      %p233 = por %p231, %p232
      %p234 = scmp.ne.s32.totalorder %s222, %s223
      %p235 = scmp.eq.s32.totalorder %s31, 3
      %p236 = por %p234, %p235
      %p238 = scmp.ne.s32.totalorder %s223, %s237
      %p239 = scmp.eq.s32.totalorder %s31, 0
      %p240 = por %p238, %p239
      %s242 = sadd.s32 %s241, 1
      %p245 = scmp.eq.s32.totalorder %s25, 3
      %p246 = scmp.ne.s32.totalorder %s241, %s243
      %p247 = scmp.eq.s32.totalorder %s25, 0
      %p248 = por %p246, %p247
      %p249 = scmp.ne.s32.totalorder %s241, %s243
      %p250 = scmp.eq.s32.totalorder %s30, 3
      %p251 = por %p249, %p250
      %p252 = scmp.ne.s32.totalorder %s243, %s244
      %p253 = scmp.eq.s32.totalorder %s30, 0
      %p254 = por %p252, %p253
      %p255 = scmp.ne.s32.totalorder %s243, %s244
      %p256 = scmp.eq.s32.totalorder %s31, 3
      %p257 = por %p255, %p256
      %p259 = scmp.ne.s32.totalorder %s244, %s258
      %p260 = scmp.eq.s32.totalorder %s31, 0
      %p261 = por %p259, %p260
      %s262 = ssub.s32 %s32, %s44
      %s263 = ssub.s32 %s33, %s40
      %s264 = sor.u32 %s262, %s263
      %p265 = scmp.eq.s32.totalorder %s264, 0
      %s267 = sadd.s32 %s266, 1
      %s268 = scalar_select %p265, %s266, %s267
      %p271 = pneg %p265
      %p272 = scmp.eq.s32.totalorder %s25, 3
      %p273 = por %p271, %p272
      %p274 = scmp.ne.s32.totalorder %s266, %s269
      %p275 = scmp.eq.s32.totalorder %s25, 0
      %p276 = por %p274, %p275
      %p277 = scmp.ne.s32.totalorder %s266, %s269
      %p278 = scmp.eq.s32.totalorder %s30, 3
      %p279 = por %p277, %p278
      %p280 = scmp.ne.s32.totalorder %s269, %s270
      %p281 = scmp.eq.s32.totalorder %s30, 0
      %p282 = por %p280, %p281
      %p283 = scmp.ne.s32.totalorder %s269, %s270
      %p284 = scmp.eq.s32.totalorder %s31, 3
      %p285 = por %p283, %p284
      %p287 = scmp.ne.s32.totalorder %s270, %s286
      %p288 = scmp.eq.s32.totalorder %s31, 0
      %p289 = por %p287, %p288
      %s290 = ssub.s32 %s32, %s44
      %s291 = ssub.s32 %s33, %s40
      %s292 = sor.u32 %s290, %s291
      %p293 = scmp.eq.s32.totalorder %s292, 0
      %s295 = sadd.s32 %s294, 1
      %s296 = scalar_select %p293, %s294, %s295
      %p299 = pneg %p293
      %p300 = scmp.eq.s32.totalorder %s25, 3
      %p301 = por %p299, %p300
      %p302 = scmp.ne.s32.totalorder %s294, %s297
      %p303 = scmp.eq.s32.totalorder %s25, 0
      %p304 = por %p302, %p303
      %p305 = scmp.ne.s32.totalorder %s294, %s297
      %p306 = scmp.eq.s32.totalorder %s30, 3
      %p307 = por %p305, %p306
      %p308 = scmp.ne.s32.totalorder %s297, %s298
      %p309 = scmp.eq.s32.totalorder %s30, 0
      %p310 = por %p308, %p309
      %p311 = scmp.ne.s32.totalorder %s297, %s298
      %p312 = scmp.eq.s32.totalorder %s31, 3
      %p313 = por %p311, %p312
      %p315 = scmp.ne.s32.totalorder %s298, %s314
      %p316 = scmp.eq.s32.totalorder %s31, 0
      %p317 = por %p315, %p316
      %s318 = ssub.s32 %s32, %s44
      %p319 = scmp.eq.s32.totalorder %s318, 0
      %s321 = sadd.s32 %s320, 1
      %s322 = scalar_select %p319, %s320, %s321
      %p325 = pneg %p319
      %p326 = scmp.eq.s32.totalorder %s25, 3
      %p327 = por %p325, %p326
      %p328 = scmp.ne.s32.totalorder %s320, %s323
      %p329 = scmp.eq.s32.totalorder %s25, 0
      %p330 = por %p328, %p329
      %p331 = scmp.ne.s32.totalorder %s320, %s323
      %p332 = scmp.eq.s32.totalorder %s30, 3
      %p333 = por %p331, %p332
      %p334 = scmp.ne.s32.totalorder %s323, %s324
      %p335 = scmp.eq.s32.totalorder %s30, 0
      %p336 = por %p334, %p335
      %p337 = scmp.ne.s32.totalorder %s323, %s324
      %p338 = scmp.eq.s32.totalorder %s31, 3
      %p339 = por %p337, %p338
      %p341 = scmp.ne.s32.totalorder %s324, %s340
      %p342 = scmp.eq.s32.totalorder %s31, 0
      %p343 = por %p341, %p342
      %p344 = scmp.le.s32.totalorder 1, %s25
      %p345 = scmp.lt.s32.totalorder %s25, 5
      %p346 = pnand %p344, %p345
      %p347 = pneg %p346
      // Predicated region
      $region9: #{tpu_custom_call.1} parent=5 // pred_check
        _
      $region10: #{tpu_custom_call.1} parent=5 // pred_check_branch
        %349 = sbr.rel (%p346) target = $region12
      $region11: #{tpu_custom_call.1} parent=5 // pred_region
        %s350 = ssub.s32 %s25, 1
        // Predicated region
        $region13: #{tpu_custom_call.1} parent=11 // pred_check
          %p351 = pneg %p86
        $region14: #{tpu_custom_call.1} parent=11 // pred_check_branch
          %353 = sbr.rel (%p351) target = $region16
        $region15: #{tpu_custom_call.1} parent=11 // pred_region
          _
        $region16: #{tpu_custom_call.1} parent=11 // pred_fallthru
          _
        // Predicated region
        $region17: #{tpu_custom_call.1} parent=11 // pred_check
          %p354 = pneg %p107
        $region18: #{tpu_custom_call.1} parent=11 // pred_check_branch
          %356 = sbr.rel (%p354) target = $region20
        $region19: #{tpu_custom_call.1} parent=11 // pred_region
          _
        $region20: #{tpu_custom_call.1} parent=11 // pred_fallthru
          _
        // Predicated region
        $region21: #{tpu_custom_call.1} parent=11 // pred_check
          %p357 = pneg %p128
        $region22: #{tpu_custom_call.1} parent=11 // pred_check_branch
          %359 = sbr.rel (%p357) target = $region24
        $region23: #{tpu_custom_call.1} parent=11 // pred_region
          _
        $region24: #{tpu_custom_call.1} parent=11 // pred_fallthru
          _
        // Predicated region
        $region25: #{tpu_custom_call.1} parent=11 // pred_check
          %p360 = pneg %p149
        $region26: #{tpu_custom_call.1} parent=11 // pred_check_branch
          %362 = sbr.rel (%p360) target = $region28
        $region27: #{tpu_custom_call.1} parent=11 // pred_region
          _
        $region28: #{tpu_custom_call.1} parent=11 // pred_fallthru
          _
        // Predicated region
        $region29: #{tpu_custom_call.1} parent=11 // pred_check
          %p363 = pneg %p170
        $region30: #{tpu_custom_call.1} parent=11 // pred_check_branch
          %365 = sbr.rel (%p363) target = $region32
        $region31: #{tpu_custom_call.1} parent=11 // pred_region
          _
        $region32: #{tpu_custom_call.1} parent=11 // pred_fallthru
          _
        // Predicated region
        $region33: #{tpu_custom_call.1} parent=11 // pred_check
          %p366 = pneg %p191
        $region34: #{tpu_custom_call.1} parent=11 // pred_check_branch
          %368 = sbr.rel (%p366) target = $region36
        $region35: #{tpu_custom_call.1} parent=11 // pred_region
          _
        $region36: #{tpu_custom_call.1} parent=11 // pred_fallthru
          _
        // Predicated region
        $region37: #{tpu_custom_call.1} parent=11 // pred_check
          %p369 = pneg %p212
        $region38: #{tpu_custom_call.1} parent=11 // pred_check_branch
          %371 = sbr.rel (%p369) target = $region40
        $region39: #{tpu_custom_call.1} parent=11 // pred_region
          _
        $region40: #{tpu_custom_call.1} parent=11 // pred_fallthru
          _
        // Predicated region
        $region41: #{tpu_custom_call.1} parent=11 // pred_check
          %p372 = pneg %p233
        $region42: #{tpu_custom_call.1} parent=11 // pred_check_branch
          %374 = sbr.rel (%p372) target = $region44
        $region43: #{tpu_custom_call.1} parent=11 // pred_region
          _
        $region44: #{tpu_custom_call.1} parent=11 // pred_fallthru
          _
        // Predicated region
        $region45: #{tpu_custom_call.1} parent=11 // pred_check
          %p375 = pneg %p254
        $region46: #{tpu_custom_call.1} parent=11 // pred_check_branch
          %377 = sbr.rel (%p375) target = $region48
        $region47: #{tpu_custom_call.1} parent=11 // pred_region
          _
        $region48: #{tpu_custom_call.1} parent=11 // pred_fallthru
          _
      $region12: #{tpu_custom_call.1} parent=5 // pred_fallthru
        _
      %p378 = scmp.lt.s32.totalorder %s25, 4
      // Predicated region
      $region49: #{tpu_custom_call.1} parent=5 // pred_check
        %p379 = pneg %p378
      $region50: #{tpu_custom_call.1} parent=5 // pred_check_branch
        %381 = sbr.rel (%p379) target = $region52
      $region51: #{tpu_custom_call.1} parent=5 // pred_region
        // Predicated region
        $region53: #{tpu_custom_call.1} parent=51 // pred_check
          %p382 = pneg %p59
        $region54: #{tpu_custom_call.1} parent=51 // pred_check_branch
          %384 = sbr.rel (%p382) target = $region56
        $region55: #{tpu_custom_call.1} parent=51 // pred_region
          %p385 = scmp.lt.s32.totalorder %s32, 1
          %s386 = scalar_select %p385, %s32, 1
          %p387 = scmp.lt.s32.totalorder %s33, 1
          %s388 = scalar_select %p387, %s33, 1
          %s389 = smul.addr %s386, 2
          %s390 = sadd.s32 %s388, %s389
          %s391 = smul.addr %s390, 4
          %s392 = scalar_lea.vmem %s0, %s391
        $region56: #{tpu_custom_call.1} parent=51 // pred_fallthru
          _
      $region52: #{tpu_custom_call.1} parent=5 // pred_fallthru
        _
      %p393 = scmp.le.s32.totalorder 1, %s25
      %p394 = scmp.lt.s32.totalorder %s25, 5
      %p395 = pnand %p393, %p394
      %p396 = pneg %p395
      // Predicated region
      $region57: #{tpu_custom_call.1} parent=5 // pred_check
        _
      $region58: #{tpu_custom_call.1} parent=5 // pred_check_branch
        %398 = sbr.rel (%p395) target = $region60
      $region59: #{tpu_custom_call.1} parent=5 // pred_region
        %s399 = ssub.s32 %s25, 1
        %p400 = scmp.lt.s32.totalorder %s34, 1
        %s401 = scalar_select %p400, %s34, 1
        %p402 = scmp.lt.s32.totalorder %s35, 1
        %s403 = scalar_select %p402, %s35, 1
        %s404 = smul.addr %s401, 2
        %s405 = sadd.s32 %s403, %s404
        %s406 = smul.addr %s405, 4
        %s407 = scalar_lea.vmem %s0, %s406
        %p408 = pneg %p65
        %p409 = pneg %p62
        %p410 = pneg %p86
        %p411 = pneg %p83
        %p412 = pneg %p107
        %p413 = pneg %p104
        %p414 = pneg %p128
        %p415 = pneg %p125
        %p416 = pneg %p149
        %p417 = pneg %p146
        %p418 = pneg %p170
        %p419 = pneg %p167
        %p420 = pneg %p191
        %p421 = pneg %p188
        %p422 = pneg %p212
        %p423 = pneg %p209
        %p424 = pneg %p233
        %p425 = pneg %p230
        %p426 = pneg %p254
        %p427 = pneg %p251
        %p428 = pneg %p282
        %p429 = pneg %p279
        %s430 = sand.u32 %s269, 1
        %s431 = scalar_lea.sflag [#allocation4], %s430
        %s432 = sand.u32 %s269, 1
        %s433 = smul.addr %s432, 16
        %s434 = scalar_lea.vmem [#allocation3], %s433
        %p435 = pneg %p310
        %p436 = pneg %p307
        %s437 = sand.u32 %s30, 1
        %s438 = scalar_lea.sflag [#allocation6], %s437
        %s439 = sand.u32 %s297, 1
        %s440 = smul.addr %s439, 16
        %s441 = scalar_lea.vmem [#allocation5], %s440
        %p442 = pneg %p336
        %p443 = pneg %p333
        %s444 = sand.u32 %s30, 1
        %s445 = scalar_lea.sflag [#allocation6], %s444
        %s446 = sand.u32 %s323, 1
        %s447 = scalar_lea.vmem [#allocation7], %s446
        %p448 = scmp.lt.s32.totalorder %s34, 1
        %s449 = scalar_select %p448, %s34, 1
        %p450 = scmp.lt.s32.totalorder %s35, 1
        %s451 = scalar_select %p450, %s35, 1
        %s452 = smul.addr %s449, 2
        %s453 = sadd.s32 %s451, %s452
        %s454 = smul.addr %s453, 4
        %s455 = scalar_lea.vmem %s0, %s454
        %v456 = vld [vmem:[%s455] sm:$0xf]
        %v457 = vld [vmem:[%s1] sm:$0xff]
        %v458 = vld [vmem:[%s1 + $0x8] sm:$0xff]
        %v459 = vld [vmem:[%s1 + $0x10] sm:$0xff]
        %v460 = vld [vmem:[%s1 + $0x18] sm:$0xff]
        %v461 = vld [vmem:[%s2] sm:$0xff]
        %v462 = vld [vmem:[%s2 + $0x8] sm:$0xff]
        %v463 = vld [vmem:[%s2 + $0x10] sm:$0xff]
        %v464 = vld [vmem:[%s2 + $0x18] sm:$0xff]
        %466 = vset.pattern.permute.xlu0 0
        %467 = vperm.xlu0 %466, %v461
        %v468 = vpop.permute.xlu0 %467
        %471 = vset.pattern.permute.xlu0 0
        %472 = vperm.xlu0 %471, %v462
        %v473 = vpop.permute.xlu0 %472
        %476 = vset.pattern.permute.xlu0 0
        %477 = vperm.xlu0 %476, %v463
        %v478 = vpop.permute.xlu0 %477
        %481 = vset.pattern.permute.xlu0 0
        %482 = vperm.xlu0 %481, %v464
        %v483 = vpop.permute.xlu0 %482
        %vm485 = vcmask 31744
        %v487 = vsel %vm485, %v457, 0
        %v490 = vsel %vm485, %v458, 0
        %v493 = vsel %vm485, %v459, 0
        %v496 = vsel %vm485, %v460, 0
        %vm498 = vcmask 1043456
        %v500 = vsel %vm498, %v456, 0
        %502 = vmatprep.subr.mxu0 0.0
        %503 = vmatpush1.msra.mxu0 0.0
        %504 = vmatprep.subr.mxu0 0.0
        %505 = vmatpush1.msra.mxu0 0.0
        %506 = vmatprep.subr.mxu0 0.0
        %507 = vmatpush1.msra.mxu0 0.0
        %508 = vmatprep.subr.mxu0 0.0
        %509 = vmatpush1.msra.mxu0 0.0
        %510 = vmatprep.subr.mxu0 0.0
        %511 = vmatpush1.msra.mxu0 0.0
        %512 = vmatprep.subr.mxu0 0.0
        %513 = vmatpush1.msra.mxu0 0.0
        %514 = vmatprep.subr.mxu0 0.0
        %515 = vmatpush1.msra.mxu0 0.0
        %516 = vmatprep.subr.mxu0 0.0
        %517 = vmatpush1.msra.mxu0 0.0
        %518 = vmatprep.subr.mxu0 0.0
        %519 = vmatpush1.msra.mxu0 0.0
        %520 = vmatprep.subr.mxu0 0.0
        %521 = vmatpush1.msra.mxu0 0.0
        %522 = vmatprep.subr.mxu0 0.0
        %523 = vmatpush1.msra.mxu0 0.0
        %524 = vmatprep.subr.mxu0 0.0
        %525 = vmatpush1.msra.mxu0 0.0
        %526 = vmatprep.subr.mxu0 0.0
        %527 = vmatpush1.msra.mxu0 0.0
        %528 = vmatprep.subr.mxu0 0.0
        %529 = vmatpush1.msra.mxu0 0.0
        %530 = vmatprep.subr.mxu0 0.0
        %531 = vmatpush1.msra.mxu0 0.0
        %532 = vmatprep.subr.mxu0 0.0
        %533 = vmatpush1.msra.mxu0 %v500
        %534 = vmatprep.subr.mxu0 0.0
        %535 = vmatpush2.msra.mxu0 0.0
        %536 = vmatprep.subr.mxu0 0.0
        %537 = vmatpush2.msra.mxu0 0.0
        %538 = vmatprep.subr.mxu0 0.0
        %539 = vmatpush2.msra.mxu0 0.0
        %540 = vmatprep.subr.mxu0 0.0
        %541 = vmatpush2.msra.mxu0 0.0
        %542 = vmatprep.subr.mxu0 0.0
        %543 = vmatpush2.msra.mxu0 0.0
        %544 = vmatprep.subr.mxu0 0.0
        %545 = vmatpush2.msra.mxu0 0.0
        %546 = vmatprep.subr.mxu0 0.0
        %547 = vmatpush2.msra.mxu0 0.0
        %548 = vmatprep.subr.mxu0 0.0
        %549 = vmatpush2.msra.mxu0 0.0
        %550 = vmatprep.subr.mxu0 0.0
        %551 = vmatpush2.msra.mxu0 0.0
        %552 = vmatprep.subr.mxu0 0.0
        %553 = vmatpush2.msra.mxu0 0.0
        %554 = vmatprep.subr.mxu0 0.0
        %555 = vmatpush2.msra.mxu0 0.0
        %556 = vmatprep.subr.mxu0 0.0
        %557 = vmatpush2.msra.mxu0 0.0
        %558 = vmatprep.subr.mxu0 0.0
        %559 = vmatpush2.msra.mxu0 0.0
        %560 = vmatprep.subr.mxu0 0.0
        %561 = vmatpush2.msra.mxu0 0.0
        %562 = vmatprep.subr.mxu0 0.0
        %563 = vmatpush2.msra.mxu0 0.0
        %564 = vmatprep.subr.mxu0 0.0
        %565 = vmatpush2.msra.mxu0 0.0
        %566 = vmatprep.mubr.f32.mxu0 0.0
        %567 = vmatmul.mubr.f32.gmra.mxu0 %v487
        %v568 = vpop.f32.mrf.mxu0
        %v569 = vadd.f32 %v468, %v568
        %v570 = vpop.f32.mrf.mxu0
        %571 = vmatprep.mubr.f32.mxu0 0.0
        %572 = vmatmul.mubr.f32.gmra.mxu0 %v490
        %v573 = vpop.f32.mrf.mxu0
        %v574 = vadd.f32 %v473, %v573
        %v575 = vpop.f32.mrf.mxu0
        %576 = vmatprep.mubr.f32.mxu0 0.0
        %577 = vmatmul.mubr.f32.gmra.mxu0 %v493
        %v578 = vpop.f32.mrf.mxu0
        %v579 = vadd.f32 %v478, %v578
        %v580 = vpop.f32.mrf.mxu0
        %581 = vmatprep.mubr.f32.mxu0 0.0
        %582 = vmatmul.mubr.f32.gmra.mxu0 %v496
        %v583 = vpop.f32.mrf.mxu0
        %v584 = vadd.f32 %v483, %v583
        %v585 = vpop.f32.mrf.mxu0
        %586 = vdwg.mxu0
        %v587 = vmax.f32 %v569, 0.0
        %v588 = vmax.f32 %v574, 0.0
        %v589 = vmax.f32 %v579, 0.0
        %v590 = vmax.f32 %v584, 0.0
        %v591 = vld [vmem:[%s3] sm:$0xff]
        %v592 = vld [vmem:[%s3 + $0x8] sm:$0xff]
        %v593 = vld [vmem:[%s4] sm:$0xff]
        %v594 = vld [vmem:[%s4 + $0x8] sm:$0xff]
        %596 = vset.pattern.permute.xlu0 0
        %597 = vperm.xlu0 %596, %v593
        %v598 = vpop.permute.xlu0 %597
        %601 = vset.pattern.permute.xlu0 0
        %602 = vperm.xlu0 %601, %v594
        %v603 = vpop.permute.xlu0 %602
        %vm605 = vcmask 261120
        %v607 = vsel %vm605, %v591, 0
        %v610 = vsel %vm605, %v592, 0
        %612 = vmatprep.subr.mxu0 0.0
        %613 = vmatpush1.msra.mxu0 0.0
        %614 = vmatprep.subr.mxu0 0.0
        %615 = vmatpush1.msra.mxu0 0.0
        %616 = vmatprep.subr.mxu0 0.0
        %617 = vmatpush1.msra.mxu0 0.0
        %618 = vmatprep.subr.mxu0 0.0
        %619 = vmatpush1.msra.mxu0 0.0
        %620 = vmatprep.subr.mxu0 0.0
        %621 = vmatpush1.msra.mxu0 0.0
        %622 = vmatprep.subr.mxu0 0.0
        %623 = vmatpush1.msra.mxu0 0.0
        %624 = vmatprep.subr.mxu0 0.0
        %625 = vmatpush1.msra.mxu0 0.0
        %626 = vmatprep.subr.mxu0 0.0
        %627 = vmatpush1.msra.mxu0 0.0
        %628 = vmatprep.subr.mxu0 0.0
        %629 = vmatpush1.msra.mxu0 0.0
        %630 = vmatprep.subr.mxu0 0.0
        %631 = vmatpush1.msra.mxu0 0.0
        %632 = vmatprep.subr.mxu0 0.0
        %633 = vmatpush1.msra.mxu0 0.0
        %634 = vmatprep.subr.mxu0 0.0
        %635 = vmatpush1.msra.mxu0 0.0
        %636 = vmatprep.subr.mxu0 0.0
        %637 = vmatpush1.msra.mxu0 %v590
        %638 = vmatprep.subr.mxu0 0.0
        %639 = vmatpush1.msra.mxu0 %v589
        %640 = vmatprep.subr.mxu0 0.0
        %641 = vmatpush1.msra.mxu0 %v588
        %642 = vmatprep.subr.mxu0 0.0
        %643 = vmatpush1.msra.mxu0 %v587
        %644 = vmatprep.subr.mxu0 0.0
        %645 = vmatpush2.msra.mxu0 0.0
        %646 = vmatprep.subr.mxu0 0.0
        %647 = vmatpush2.msra.mxu0 0.0
        %648 = vmatprep.subr.mxu0 0.0
        %649 = vmatpush2.msra.mxu0 0.0
        %650 = vmatprep.subr.mxu0 0.0
        %651 = vmatpush2.msra.mxu0 0.0
        %652 = vmatprep.subr.mxu0 0.0
        %653 = vmatpush2.msra.mxu0 0.0
        %654 = vmatprep.subr.mxu0 0.0
        %655 = vmatpush2.msra.mxu0 0.0
        %656 = vmatprep.subr.mxu0 0.0
        %657 = vmatpush2.msra.mxu0 0.0
        %658 = vmatprep.subr.mxu0 0.0
        %659 = vmatpush2.msra.mxu0 0.0
        %660 = vmatprep.subr.mxu0 0.0
        %661 = vmatpush2.msra.mxu0 0.0
        %662 = vmatprep.subr.mxu0 0.0
        %663 = vmatpush2.msra.mxu0 0.0
        %664 = vmatprep.subr.mxu0 0.0
        %665 = vmatpush2.msra.mxu0 0.0
        %666 = vmatprep.subr.mxu0 0.0
        %667 = vmatpush2.msra.mxu0 0.0
        %668 = vmatprep.subr.mxu0 0.0
        %669 = vmatpush2.msra.mxu0 0.0
        %670 = vmatprep.subr.mxu0 0.0
        %671 = vmatpush2.msra.mxu0 0.0
        %672 = vmatprep.subr.mxu0 0.0
        %673 = vmatpush2.msra.mxu0 0.0
        %674 = vmatprep.subr.mxu0 0.0
        %675 = vmatpush2.msra.mxu0 0.0
        %676 = vmatprep.mubr.f32.mxu0 0.0
        %677 = vmatmul.mubr.f32.gmra.mxu0 %v607
        %v678 = vpop.f32.mrf.mxu0
        %v679 = vadd.f32 %v598, %v678
        %v680 = vpop.f32.mrf.mxu0
        %681 = vmatprep.mubr.f32.mxu0 0.0
        %682 = vmatmul.mubr.f32.gmra.mxu0 %v610
        %v683 = vpop.f32.mrf.mxu0
        %v684 = vadd.f32 %v603, %v683
        %v685 = vpop.f32.mrf.mxu0
        %686 = vdwg.mxu0
        %v687 = vmax.f32 %v679, 0.0
        %v688 = vmax.f32 %v684, 0.0
        %v689 = vld [vmem:[%s5] sm:$0xff]
        %v690 = vld [vmem:[%s5 + $0x8] sm:$0xff]
        %v691 = vld [vmem:[%s6] sm:$0xff]
        %v692 = vld [vmem:[%s6 + $0x8] sm:$0xff]
        %694 = vset.pattern.permute.xlu0 0
        %695 = vperm.xlu0 %694, %v691
        %v696 = vpop.permute.xlu0 %695
        %699 = vset.pattern.permute.xlu0 0
        %700 = vperm.xlu0 %699, %v692
        %v701 = vpop.permute.xlu0 %700
        %vm703 = vcmask 130048
        %v705 = vsel %vm703, %v689, 0
        %v708 = vsel %vm703, %v690, 0
        %710 = vmatprep.subr.mxu0 0.0
        %711 = vmatpush1.msra.mxu0 0.0
        %712 = vmatprep.subr.mxu0 0.0
        %713 = vmatpush1.msra.mxu0 0.0
        %714 = vmatprep.subr.mxu0 0.0
        %715 = vmatpush1.msra.mxu0 0.0
        %716 = vmatprep.subr.mxu0 0.0
        %717 = vmatpush1.msra.mxu0 0.0
        %718 = vmatprep.subr.mxu0 0.0
        %719 = vmatpush1.msra.mxu0 0.0
        %720 = vmatprep.subr.mxu0 0.0
        %721 = vmatpush1.msra.mxu0 0.0
        %722 = vmatprep.subr.mxu0 0.0
        %723 = vmatpush1.msra.mxu0 0.0
        %724 = vmatprep.subr.mxu0 0.0
        %725 = vmatpush1.msra.mxu0 0.0
        %726 = vmatprep.subr.mxu0 0.0
        %727 = vmatpush1.msra.mxu0 0.0
        %728 = vmatprep.subr.mxu0 0.0
        %729 = vmatpush1.msra.mxu0 0.0
        %730 = vmatprep.subr.mxu0 0.0
        %731 = vmatpush1.msra.mxu0 0.0
        %732 = vmatprep.subr.mxu0 0.0
        %733 = vmatpush1.msra.mxu0 0.0
        %734 = vmatprep.subr.mxu0 0.0
        %735 = vmatpush1.msra.mxu0 0.0
        %736 = vmatprep.subr.mxu0 0.0
        %737 = vmatpush1.msra.mxu0 0.0
        %738 = vmatprep.subr.mxu0 0.0
        %739 = vmatpush1.msra.mxu0 %v688
        %740 = vmatprep.subr.mxu0 0.0
        %741 = vmatpush1.msra.mxu0 %v687
        %742 = vmatprep.subr.mxu0 0.0
        %743 = vmatpush2.msra.mxu0 0.0
        %744 = vmatprep.subr.mxu0 0.0
        %745 = vmatpush2.msra.mxu0 0.0
        %746 = vmatprep.subr.mxu0 0.0
        %747 = vmatpush2.msra.mxu0 0.0
        %748 = vmatprep.subr.mxu0 0.0
        %749 = vmatpush2.msra.mxu0 0.0
        %750 = vmatprep.subr.mxu0 0.0
        %751 = vmatpush2.msra.mxu0 0.0
        %752 = vmatprep.subr.mxu0 0.0
        %753 = vmatpush2.msra.mxu0 0.0
        %754 = vmatprep.subr.mxu0 0.0
        %755 = vmatpush2.msra.mxu0 0.0
        %756 = vmatprep.subr.mxu0 0.0
        %757 = vmatpush2.msra.mxu0 0.0
        %758 = vmatprep.subr.mxu0 0.0
        %759 = vmatpush2.msra.mxu0 0.0
        %760 = vmatprep.subr.mxu0 0.0
        %761 = vmatpush2.msra.mxu0 0.0
        %762 = vmatprep.subr.mxu0 0.0
        %763 = vmatpush2.msra.mxu0 0.0
        %764 = vmatprep.subr.mxu0 0.0
        %765 = vmatpush2.msra.mxu0 0.0
        %766 = vmatprep.subr.mxu0 0.0
        %767 = vmatpush2.msra.mxu0 0.0
        %768 = vmatprep.subr.mxu0 0.0
        %769 = vmatpush2.msra.mxu0 0.0
        %770 = vmatprep.subr.mxu0 0.0
        %771 = vmatpush2.msra.mxu0 0.0
        %772 = vmatprep.subr.mxu0 0.0
        %773 = vmatpush2.msra.mxu0 0.0
        %774 = vmatprep.mubr.f32.mxu0 0.0
        %775 = vmatmul.mubr.f32.gmra.mxu0 %v705
        %v776 = vpop.f32.mrf.mxu0
        %v777 = vadd.f32 %v696, %v776
        %v778 = vpop.f32.mrf.mxu0
        %779 = vmatprep.mubr.f32.mxu0 0.0
        %780 = vmatmul.mubr.f32.gmra.mxu0 %v708
        %v781 = vpop.f32.mrf.mxu0
        %v782 = vadd.f32 %v701, %v781
        %v783 = vpop.f32.mrf.mxu0
        %784 = vdwg.mxu0
        %v785 = vxor.u32 %v777, 2147483648
        %v786 = vxor.u32 %v782, 2147483648
        %v787 = vmul.f32 %v785, 1.442695
        %v788 = vpow.pop %v787
        %v789 = vmul.f32 %v786, 1.442695
        %v790 = vpow.pop %v789
        %v791 = vadd.f32 %v788, 1.0
        %v792 = vadd.f32 %v790, 1.0
        %v793 = vrcp.pop %v791
        %v794 = vmul.f32 1.0, %v793
        %v795 = vrcp.pop %v792
        %v796 = vmul.f32 1.0, %v795
        %v797 = vmul.f32 %v794, %v794
        %v798 = vmul.f32 %v796, %v796
        %v799 = vadd.f32 %v797, %v798
        %v800 = vrot.slane %v799, 4
        %v801 = vadd.f32 %v799, %v800
        %v802 = vrot.slane %v801, 2
        %v803 = vadd.f32 %v801, %v802
        %v804 = vrot.slane %v803, 1
        %v805 = vadd.f32 %v803, %v804
        %v806 = vld [vmem:[%s7] sm:$0xff]
        %v807 = vld [vmem:[%s7 + $0x8] sm:$0xff]
        %v808 = vld [vmem:[%s7 + $0x10] sm:$0xff]
        %v809 = vld [vmem:[%s7 + $0x18] sm:$0xff]
        %v811 = vsel %vm703, %v806, 0
        %v814 = vsel %vm703, %v807, 0
        %v817 = vsel %vm703, %v808, 0
        %v820 = vsel %vm703, %v809, 0
        %822 = vmatprep.subr.mxu0 0.0
        %823 = vmatpush1.msra.mxu0 0.0
        %824 = vmatprep.subr.mxu0 0.0
        %825 = vmatpush1.msra.mxu0 0.0
        %826 = vmatprep.subr.mxu0 0.0
        %827 = vmatpush1.msra.mxu0 0.0
        %828 = vmatprep.subr.mxu0 0.0
        %829 = vmatpush1.msra.mxu0 0.0
        %830 = vmatprep.subr.mxu0 0.0
        %831 = vmatpush1.msra.mxu0 0.0
        %832 = vmatprep.subr.mxu0 0.0
        %833 = vmatpush1.msra.mxu0 0.0
        %834 = vmatprep.subr.mxu0 0.0
        %835 = vmatpush1.msra.mxu0 0.0
        %836 = vmatprep.subr.mxu0 0.0
        %837 = vmatpush1.msra.mxu0 0.0
        %838 = vmatprep.subr.mxu0 0.0
        %839 = vmatpush1.msra.mxu0 0.0
        %840 = vmatprep.subr.mxu0 0.0
        %841 = vmatpush1.msra.mxu0 0.0
        %842 = vmatprep.subr.mxu0 0.0
        %843 = vmatpush1.msra.mxu0 0.0
        %844 = vmatprep.subr.mxu0 0.0
        %845 = vmatpush1.msra.mxu0 0.0
        %846 = vmatprep.subr.mxu0 0.0
        %847 = vmatpush1.msra.mxu0 0.0
        %848 = vmatprep.subr.mxu0 0.0
        %849 = vmatpush1.msra.mxu0 0.0
        %850 = vmatprep.subr.mxu0 0.0
        %851 = vmatpush1.msra.mxu0 %v796
        %852 = vmatprep.subr.mxu0 0.0
        %853 = vmatpush1.msra.mxu0 %v794
        %854 = vmatprep.subr.mxu0 0.0
        %855 = vmatpush2.msra.mxu0 0.0
        %856 = vmatprep.subr.mxu0 0.0
        %857 = vmatpush2.msra.mxu0 0.0
        %858 = vmatprep.subr.mxu0 0.0
        %859 = vmatpush2.msra.mxu0 0.0
        %860 = vmatprep.subr.mxu0 0.0
        %861 = vmatpush2.msra.mxu0 0.0
        %862 = vmatprep.subr.mxu0 0.0
        %863 = vmatpush2.msra.mxu0 0.0
        %864 = vmatprep.subr.mxu0 0.0
        %865 = vmatpush2.msra.mxu0 0.0
        %866 = vmatprep.subr.mxu0 0.0
        %867 = vmatpush2.msra.mxu0 0.0
        %868 = vmatprep.subr.mxu0 0.0
        %869 = vmatpush2.msra.mxu0 0.0
        %870 = vmatprep.subr.mxu0 0.0
        %871 = vmatpush2.msra.mxu0 0.0
        %872 = vmatprep.subr.mxu0 0.0
        %873 = vmatpush2.msra.mxu0 0.0
        %874 = vmatprep.subr.mxu0 0.0
        %875 = vmatpush2.msra.mxu0 0.0
        %876 = vmatprep.subr.mxu0 0.0
        %877 = vmatpush2.msra.mxu0 0.0
        %878 = vmatprep.subr.mxu0 0.0
        %879 = vmatpush2.msra.mxu0 0.0
        %880 = vmatprep.subr.mxu0 0.0
        %881 = vmatpush2.msra.mxu0 0.0
        %882 = vmatprep.subr.mxu0 0.0
        %883 = vmatpush2.msra.mxu0 0.0
        %884 = vmatprep.subr.mxu0 0.0
        %885 = vmatpush2.msra.mxu0 0.0
        %886 = vmatprep.mubr.f32.mxu0 0.0
        %887 = vmatmul.mubr.f32.gmra.mxu0 %v811
        %v888 = vpop.f32.mrf.mxu0
        %v889 = vadd.f32 0.0, %v888
        %v890 = vpop.f32.mrf.mxu0
        %891 = vmatprep.mubr.f32.mxu0 0.0
        %892 = vmatmul.mubr.f32.gmra.mxu0 %v814
        %v893 = vpop.f32.mrf.mxu0
        %v894 = vadd.f32 0.0, %v893
        %v895 = vpop.f32.mrf.mxu0
        %896 = vmatprep.mubr.f32.mxu0 0.0
        %897 = vmatmul.mubr.f32.gmra.mxu0 %v817
        %v898 = vpop.f32.mrf.mxu0
        %v899 = vadd.f32 0.0, %v898
        %v900 = vpop.f32.mrf.mxu0
        %901 = vmatprep.mubr.f32.mxu0 0.0
        %902 = vmatmul.mubr.f32.gmra.mxu0 %v820
        %v903 = vpop.f32.mrf.mxu0
        %v904 = vadd.f32 0.0, %v903
        %v905 = vpop.f32.mrf.mxu0
        %906 = vdwg.mxu0
        %v907 = vld [vmem:[%s8] sm:$0xff]
        %v908 = vld [vmem:[%s8 + $0x8] sm:$0xff]
        %v909 = vld [vmem:[%s8 + $0x10] sm:$0xff]
        %v910 = vld [vmem:[%s8 + $0x18] sm:$0xff]
        %912 = vset.pattern.permute.xlu0 0
        %913 = vperm.xlu0 %912, %v907
        %v914 = vpop.permute.xlu0 %913
        %917 = vset.pattern.permute.xlu0 0
        %918 = vperm.xlu0 %917, %v908
        %v919 = vpop.permute.xlu0 %918
        %922 = vset.pattern.permute.xlu0 0
        %923 = vperm.xlu0 %922, %v909
        %v924 = vpop.permute.xlu0 %923
        %927 = vset.pattern.permute.xlu0 0
        %928 = vperm.xlu0 %927, %v910
        %v929 = vpop.permute.xlu0 %928
        %v931 = vadd.f32 %v805, %v914
        %v932 = vadd.f32 %v805, %v919
        %v933 = vadd.f32 %v805, %v924
        %v934 = vadd.f32 %v805, %v929
        %v935 = vadd.f32 %v931, %v889
        %v936 = vadd.f32 %v932, %v894
        %v937 = vadd.f32 %v933, %v899
        %v938 = vadd.f32 %v934, %v904
        %v939 = vmax.f32 %v935, 0.0
        %v940 = vmax.f32 %v936, 0.0
        %v941 = vmax.f32 %v937, 0.0
        %v942 = vmax.f32 %v938, 0.0
        %v943 = vsub.f32 0.0, %v939
        %v944 = vsub.f32 0.0, %v940
        %v945 = vsub.f32 0.0, %v941
        %v946 = vsub.f32 0.0, %v942
        %v947 = vmul.f32 %v943, 1.442695
        %v948 = vpow.pop %v947
        %v949 = vmul.f32 %v944, 1.442695
        %v950 = vpow.pop %v949
        %v951 = vmul.f32 %v945, 1.442695
        %v952 = vpow.pop %v951
        %v953 = vmul.f32 %v946, 1.442695
        %v954 = vpow.pop %v953
        %v955 = vpack.c.bf16 %v940, %v939
        %v956 = vpack.c.bf16 %v942, %v941
        %v959 = vunpack.c.l.b16 %v955
        %v960 = vunpack.c.h.b16 %v955
        %v961 = vunpack.c.l.b16 %v956
        %v962 = vunpack.c.h.b16 %v956
        %v963 = vpack.c.b16 %v959, %v959
        %v964 = vpack.c.b16 %v960, %v960
        %v965 = vpack.c.b16 %v961, %v961
        %v966 = vpack.c.b16 %v962, %v962
        %971 = vst [vmem:[%s441] sm:$0xf] %v963
        %972 = vst [vmem:[%s441 + $0x4] sm:$0xf] %v964
        %973 = vst [vmem:[%s441 + $0x8] sm:$0xf] %v965
        %974 = vst [vmem:[%s441 + $0xc] sm:$0xf] %v966
        %v975 = vpack.c.bf16 %v950, %v948
        %v976 = vpack.c.bf16 %v954, %v952
        %v979 = vunpack.c.l.b16 %v975
        %v980 = vunpack.c.h.b16 %v975
        %v981 = vunpack.c.l.b16 %v976
        %v982 = vunpack.c.h.b16 %v976
        %v983 = vpack.c.b16 %v979, %v979
        %v984 = vpack.c.b16 %v980, %v980
        %v985 = vpack.c.b16 %v981, %v981
        %v986 = vpack.c.b16 %v982, %v982
        %991 = vst [vmem:[%s434] sm:$0xf] %v983
        %992 = vst [vmem:[%s434 + $0x4] sm:$0xf] %v984
        %993 = vst [vmem:[%s434 + $0x8] sm:$0xf] %v985
        %994 = vst [vmem:[%s434 + $0xc] sm:$0xf] %v986
        %995 = vmin.xlane.f32.xlu0 %v939
        %v996 = vpop.xlane.xlu0 %995
        %997 = vmin.xlane.f32.xlu0 %v940
        %v998 = vpop.xlane.xlu0 %997
        %999 = vmin.xlane.f32.xlu0 %v941
        %v1000 = vpop.xlane.xlu0 %999
        %1001 = vmin.xlane.f32.xlu0 %v942
        %v1002 = vpop.xlane.xlu0 %1001
        %p1003 = scmp.eq.s32.totalorder %s35, 0
        // Predicated region
        $region61: #{tpu_custom_call.1} parent=59 // pred_check
          %p1004 = pneg %p1003
        $region62: #{tpu_custom_call.1} parent=59 // pred_check_branch
          %1006 = sbr.rel (%p1004) target = $region64
        $region63: #{tpu_custom_call.1} parent=59 // pred_region
          %vm1007 = vcmask 7168
          %1008 = vst.msk [vmem:[#allocation2] sm:$0xff] %vm1007, inf
          %1009 = vst.msk [vmem:[#allocation2 + $0x8] sm:$0xff] %vm1007, inf
          %1010 = vst.msk [vmem:[#allocation2 + $0x10] sm:$0xff] %vm1007, inf
          %1011 = vst.msk [vmem:[#allocation2 + $0x18] sm:$0xff] %vm1007, inf
        $region64: #{tpu_custom_call.1} parent=59 // pred_fallthru
          _
        %v1012 = vld [vmem:[#allocation2] sm:$0xff]
        %v1013 = vld [vmem:[#allocation2 + $0x8] sm:$0xff]
        %v1014 = vld [vmem:[#allocation2 + $0x10] sm:$0xff]
        %v1015 = vld [vmem:[#allocation2 + $0x18] sm:$0xff]
        %v1016 = vmin.f32 %v1012, %v996
        %v1017 = vmin.f32 %v1013, %v998
        %v1018 = vmin.f32 %v1014, %v1000
        %v1019 = vmin.f32 %v1015, %v1002
        %vm1020 = vcmask 7168
        %1021 = vst.msk [vmem:[#allocation2] sm:$0xff] %vm1020, %v1016
        %1022 = vst.msk [vmem:[#allocation2 + $0x8] sm:$0xff] %vm1020, %v1017
        %1023 = vst.msk [vmem:[#allocation2 + $0x10] sm:$0xff] %vm1020, %v1018
        %1024 = vst.msk [vmem:[#allocation2 + $0x18] sm:$0xff] %vm1020, %v1019
        %p1025 = scmp.eq.s32.totalorder %s35, 1
        // Predicated region
        $region65: #{tpu_custom_call.1} parent=59 // pred_check
          %p1026 = pneg %p1025
        $region66: #{tpu_custom_call.1} parent=59 // pred_check_branch
          %1028 = sbr.rel (%p1026) target = $region68
        $region67: #{tpu_custom_call.1} parent=59 // pred_region
          %v1029 = vld [vmem:[#allocation2] sm:$0xff]
          %v1030 = vld [vmem:[#allocation2 + $0x8] sm:$0xff]
          %v1031 = vld [vmem:[#allocation2 + $0x10] sm:$0xff]
          %v1032 = vld [vmem:[#allocation2 + $0x18] sm:$0xff]
          %v1033 = vsub.f32 0.0, %v1029
          %v1034 = vsub.f32 0.0, %v1030
          %v1035 = vsub.f32 0.0, %v1031
          %v1036 = vsub.f32 0.0, %v1032
          %v1037 = vmul.f32 %v1033, 1.442695
          %v1038 = vpow.pop %v1037
          %v1039 = vmul.f32 %v1034, 1.442695
          %v1040 = vpow.pop %v1039
          %v1041 = vmul.f32 %v1035, 1.442695
          %v1042 = vpow.pop %v1041
          %v1043 = vmul.f32 %v1036, 1.442695
          %v1044 = vpow.pop %v1043
          %v1045 = vld [vmem:[%s9] sm:$0xff]
          %v1046 = vld [vmem:[%s9 + $0x8] sm:$0xff]
          %v1047 = vld [vmem:[%s9 + $0x10] sm:$0xff]
          %v1048 = vld [vmem:[%s9 + $0x18] sm:$0xff]
          %1050 = vset.pattern.permute.xlu0 0
          %1051 = vperm.xlu0 %1050, %v1038
          %v1052 = vpop.permute.xlu0 %1051
          %1055 = vset.pattern.permute.xlu0 0
          %1056 = vperm.xlu0 %1055, %v1040
          %v1057 = vpop.permute.xlu0 %1056
          %1060 = vset.pattern.permute.xlu0 0
          %1061 = vperm.xlu0 %1060, %v1042
          %v1062 = vpop.permute.xlu0 %1061
          %1065 = vset.pattern.permute.xlu0 0
          %1066 = vperm.xlu0 %1065, %v1044
          %v1067 = vpop.permute.xlu0 %1066
          %v1069 = vmul.f32 %v1045, %v1052
          %v1070 = vmul.f32 %v1046, %v1057
          %v1071 = vmul.f32 %v1047, %v1062
          %v1072 = vmul.f32 %v1048, %v1067
          %v1073 = vsel %vm485, %v1069, 0.0
          %v1074 = vsel %vm485, %v1070, 0.0
          %v1075 = vadd.f32 %v1073, %v1074
          %v1076 = vsel %vm485, %v1071, 0.0
          %v1077 = vadd.f32 %v1075, %v1076
          %v1078 = vsel %vm485, %v1072, 0.0
          %v1079 = vadd.f32 %v1077, %v1078
          %v1080 = vrot.slane %v1079, 4
          %v1081 = vadd.f32 %v1079, %v1080
          %v1082 = vrot.slane %v1081, 2
          %v1083 = vadd.f32 %v1081, %v1082
          %v1084 = vrot.slane %v1083, 1
          %v1085 = vadd.f32 %v1083, %v1084
          %vm1086 = vcmask 24576
          %1087 = vst.msk [vmem:[%s447] sm:$0x1] %vm1086, %v1085
        $region68: #{tpu_custom_call.1} parent=59 // pred_fallthru
          _
        %s1088 = sand.u32 %s269, 1
        %s1089 = scalar_lea.sflag [#allocation4], %s1088
        %s1090 = sand.u32 %s269, 1
        %s1091 = smul.addr %s1090, 16
        %s1092 = scalar_lea.vmem [#allocation3], %s1091
        %s1093 = sand.u32 %s30, 1
        %s1094 = scalar_lea.sflag [#allocation6], %s1093
        %s1095 = sand.u32 %s297, 1
        %s1096 = smul.addr %s1095, 16
        %s1097 = scalar_lea.vmem [#allocation5], %s1096
        %s1098 = sand.u32 %s30, 1
        %s1099 = scalar_lea.sflag [#allocation6], %s1098
        %s1100 = sand.u32 %s323, 1
        %s1101 = scalar_lea.vmem [#allocation7], %s1100
        // Predicated region
        $region69: #{tpu_custom_call.1} parent=59 // pred_check
          %p1102 = pneg %p279
        $region70: #{tpu_custom_call.1} parent=59 // pred_check_branch
          %1104 = sbr.rel (%p1102) target = $region72
        $region71: #{tpu_custom_call.1} parent=59 // pred_region
          %s1106 = ssub.s32 256, 256
          %1107 = vsyncadd %s1089, %s1106
          %s1108 = smul.addr %s34, 8
          %s1109 = sadd.s32 %s35, %s1108
          %s1110 = smul.addr %s1109, 64
          %s1111 = scalar_lea.hbm %s10, %s1110
          %s1112 = sshll.u32 %s1092, 4
          %s1113 = int_to_ptr.vmem [resolvable:$true] %s1112
          %1118 = dma.vmem_to_hbm [thread:$0]  %s1113, 256, %s1111, %s1089, 64, 128, 4
        $region72: #{tpu_custom_call.1} parent=59 // pred_fallthru
          _
        // Predicated region
        $region73: #{tpu_custom_call.1} parent=59 // pred_check
          %p1119 = pneg %p307
        $region74: #{tpu_custom_call.1} parent=59 // pred_check_branch
          %1121 = sbr.rel (%p1119) target = $region76
        $region75: #{tpu_custom_call.1} parent=59 // pred_region
          %s1123 = ssub.s32 256, 256
          %1124 = vsyncadd %s1094, %s1123
          %s1125 = smul.addr %s34, 8
          %s1126 = sadd.s32 %s35, %s1125
          %s1127 = smul.addr %s1126, 64
          %s1128 = scalar_lea.hbm %s11, %s1127
          %s1129 = sshll.u32 %s1097, 4
          %s1130 = int_to_ptr.vmem [resolvable:$true] %s1129
          %1135 = dma.vmem_to_hbm [thread:$0]  %s1130, 256, %s1128, %s1094, 64, 128, 4
        $region76: #{tpu_custom_call.1} parent=59 // pred_fallthru
          _
        // Predicated region
        $region77: #{tpu_custom_call.1} parent=59 // pred_check
          %p1136 = pneg %p333
        $region78: #{tpu_custom_call.1} parent=59 // pred_check_branch
          %1138 = sbr.rel (%p1136) target = $region80
        $region79: #{tpu_custom_call.1} parent=59 // pred_region
          %s1140 = ssub.s32 16, 16
          %1141 = vsyncadd %s1099, %s1140
          %s1142 = smul.addr %s34, 16
          %s1143 = scalar_lea.hbm %s12, %s1142
          %s1145 = sshll.u32 %s1101, 4
          %s1146 = int_to_ptr.vmem [resolvable:$true] %s1145
          %1148 = dma.vmem_to_hbm [thread:$0]  %s1146, 16, %s1143, %s1099
        $region80: #{tpu_custom_call.1} parent=59 // pred_fallthru
          _
      $region60: #{tpu_custom_call.1} parent=5 // pred_fallthru
        _
      %p1149 = scmp.le.s32.totalorder 2, %s25
      // Predicated region
      $region81: #{tpu_custom_call.1} parent=5 // pred_check
        %p1150 = pneg %p1149
      $region82: #{tpu_custom_call.1} parent=5 // pred_check_branch
        %1152 = sbr.rel (%p1150) target = $region84
      $region83: #{tpu_custom_call.1} parent=5 // pred_region
        %s1153 = ssub.s32 %s25, 2
        // Predicated region
        $region85: #{tpu_custom_call.1} parent=83 // pred_check
          %p1154 = pneg %p285
        $region86: #{tpu_custom_call.1} parent=83 // pred_check_branch
          %1156 = sbr.rel (%p1154) target = $region88
        $region87: #{tpu_custom_call.1} parent=83 // pred_region
          %s1157 = sand.u32 %s270, 1
          %s1158 = scalar_lea.sflag [#allocation4], %s1157
          %s1159 = sand.u32 %s270, 1
          %s1160 = smul.addr %s1159, 16
          %s1161 = scalar_lea.vmem [#allocation3], %s1160
          %1162 = dma.done %s1158, 256
        $region88: #{tpu_custom_call.1} parent=83 // pred_fallthru
          _
        // Predicated region
        $region89: #{tpu_custom_call.1} parent=83 // pred_check
          %p1163 = pneg %p313
        $region90: #{tpu_custom_call.1} parent=83 // pred_check_branch
          %1165 = sbr.rel (%p1163) target = $region92
        $region91: #{tpu_custom_call.1} parent=83 // pred_region
          %s1166 = sand.u32 %s31, 1
          %s1167 = scalar_lea.sflag [#allocation6], %s1166
          %s1168 = sand.u32 %s298, 1
          %s1169 = smul.addr %s1168, 16
          %s1170 = scalar_lea.vmem [#allocation5], %s1169
          %1171 = dma.done %s1167, 256
        $region92: #{tpu_custom_call.1} parent=83 // pred_fallthru
          _
        // Predicated region
        $region93: #{tpu_custom_call.1} parent=83 // pred_check
          %p1172 = pneg %p339
        $region94: #{tpu_custom_call.1} parent=83 // pred_check_branch
          %1174 = sbr.rel (%p1172) target = $region96
        $region95: #{tpu_custom_call.1} parent=83 // pred_region
          %s1175 = sand.u32 %s31, 1
          %s1176 = scalar_lea.sflag [#allocation6], %s1175
          %s1177 = sand.u32 %s324, 1
          %s1178 = scalar_lea.vmem [#allocation7], %s1177
          %1179 = dma.done %s1176, 16
        $region96: #{tpu_custom_call.1} parent=83 // pred_fallthru
          _
      $region84: #{tpu_custom_call.1} parent=5 // pred_fallthru
        _
    $region6: #{tpu_custom_call.1} parent=1 // loop_footer
      %s29 = sadd.s32 1, %s25
    $region7: #{tpu_custom_call.1} parent=1 // loop_footer_branch
      %24 = sbr.rel target = $region3
    $region8: #{tpu_custom_call.1} parent=1 // loop_exit
      _
    %1180 = vsyncpa [#allocation4], 1
    %s1181 = scalar_lea.sflag [#allocation4], 1
    %1182 = vsyncpa %s1181, 1
    %1183 = vsyncpa [#allocation6], 1
    %s1184 = scalar_lea.sflag [#allocation6], 1
    %1185 = vsyncpa %s1184, 1

</llo_original>
